<compile_context>
chip_gen: v7x
topology: tpu7x:2x2x1
jax: 0.10.0
libtpu: 0.0.40
codegen_flags: <defaults>
</compile_context>

<pallas_src>
import numpy as np
import jax
import jax.numpy as jnp
from jax.experimental import pallas as pl
from jax.experimental.pallas import tpu as pltpu

EPS = 1e-5  # nn.BatchNorm2d default eps


def residual_block_kernel(x_ref, b1_ref, b2_ref, pool_ref,
                          g1_ref, be1_ref, g2_ref, be2_ref,
                          o_ref, pad_ref):
    # x_ref   : (N, H, W*C)        input in NHWC with (W, C) merged into the lane axis
    # b1_ref  : (3, Wp*C, W*C)     block-Toeplitz conv1 weights (one block per vertical tap)
    # b2_ref  : (3, Wp*C, W*C)     block-Toeplitz conv2 weights
    # pool_ref: (W*C, W*C)         per-channel pool/broadcast matrix for BN stats
    # g*/be*  : (1, W*C)           BN gamma/beta tiled into slab layout
    # o_ref   : (N*H, W*C)         lane-dense output slab
    # pad_ref : (N, Hp, Wp*C)      shared zero-padded activation scratch (reused by both convs)
    N, H, WC = x_ref.shape
    _, Hp, WpC = pad_ref.shape
    C = (WpC - WC) // 2
    M = N * H
    inv_cnt = 1.0 / float(M * (WC // C))  # 1 / (N*H*W)

    # ---- zero ONLY the halo of the padded scratch, once (interior is always overwritten) ----
    pad_ref[:, 0:1, :] = jnp.zeros((N, 1, WpC), jnp.float32)
    pad_ref[:, Hp - 1:Hp, :] = jnp.zeros((N, 1, WpC), jnp.float32)
    pad_ref[:, :, 0:C] = jnp.zeros((N, Hp, C), jnp.float32)
    pad_ref[:, :, WpC - C:WpC] = jnp.zeros((N, Hp, C), jnp.float32)

    def conv3x3(b_ref):
        # 3 MXU pushes (one per vertical tap), K = Wp*C; horizontal taps + channel
        # mixing are folded into the block-Toeplitz weights, so the only data prep
        # is a sublane-offset ref slice + leading-dim merge (no lane relayout).
        acc = jnp.zeros((M, WC), jnp.float32)
        for ky in range(3):
            lhs = pad_ref[:, ky:ky + H, :].reshape(M, WpC)
            acc = acc + jnp.dot(lhs, b_ref[ky], preferred_element_type=jnp.float32)
        return acc

    def batchnorm(acc, g_ref, b_ref):
        # Fused training-mode batch stats: one pass for sum and sum-of-squares,
        # var = E[x^2] - E[x]^2, f32 accumulators.  The per-channel pooling +
        # broadcast back to slab layout is a single tiny (1,WC)@(WC,WC) matmul.
        colsum = jnp.sum(acc, axis=0, keepdims=True)            # (1, W*C) sublane reduce
        colsq = jnp.sum(acc * acc, axis=0, keepdims=True)       # (1, W*C)
        mean = jnp.dot(colsum, pool_ref[...], preferred_element_type=jnp.float32) * inv_cnt
        ex2 = jnp.dot(colsq, pool_ref[...], preferred_element_type=jnp.float32) * inv_cnt
        var = ex2 - mean * mean
        scale = g_ref[...] * jax.lax.rsqrt(var + EPS)
        shift = b_ref[...] - mean * scale
        return acc * scale + shift

    # ---- conv1 -> bn1 -> ReLU ----
    pad_ref[:, 1:1 + H, C:C + WC] = x_ref[...]                  # in-kernel zero-padding
    h = jnp.maximum(batchnorm(conv3x3(b1_ref), g1_ref, be1_ref), 0.0)

    # ---- conv2 -> bn2 (reuse the same padded scratch; halo is still zero) ----
    pad_ref[:, 1:1 + H, C:C + WC] = h.reshape(N, H, WC)
    ha = batchnorm(conv3x3(b2_ref), g2_ref, be2_ref)

    # ---- identity shortcut + ReLU, lane-dense store ----
    o_ref[...] = jnp.maximum(ha + x_ref[...].reshape(M, WC), 0.0)


def _build_block_toeplitz(w_oihw, W):
    """(Cout, Cin, 3, 3) PyTorch conv weight -> (3, (W+2)*Cin, W*Cout) block-Toeplitz
    matrices so that (padded input row, flattened as Wp*Cin) @ B[ky] yields the
    conv contribution of vertical tap ky directly in (W*Cout) slab layout."""
    Cout, Cin, KH, KW = w_oihw.shape
    Wp = W + 2
    ky, kx, xx, ci, co = np.meshgrid(np.arange(KH), np.arange(KW), np.arange(W),
                                     np.arange(Cin), np.arange(Cout), indexing="ij")
    rows = (xx + kx) * Cin + ci          # padded input lane index
    cols = xx * Cout + co                # output slab lane index
    vals = w_oihw.astype(jnp.float32)[co, ci, ky, kx]
    B = jnp.zeros((KH, Wp * Cin, W * Cout), jnp.float32)
    return B.at[ky, rows, cols].set(vals)


def residual_block(x_nchw, w1_oihw, w2_oihw, g1, b1, g2, b2):
    """x_nchw: (N, Cin, H, W) float32; conv weights in PyTorch OIHW layout."""
    N, Cin, H, W = x_nchw.shape
    Cout = w1_oihw.shape[0]
    assert Cin == Cout, "identity shortcut requires channel_in == channel_out"
    Hp, Wp = H + 2, W + 2
    WC = W * Cout

    # NCHW -> NHWC slab (N, H, W*C); NO jnp.pad here (padding happens in-kernel).
    x_slab = jnp.transpose(x_nchw, (0, 2, 3, 1)).astype(jnp.float32).reshape(N, H, W * Cin)

    b1t = _build_block_toeplitz(w1_oihw, W)                    # (3, Wp*Cin, W*Cout)
    b2t = _build_block_toeplitz(w2_oihw, W)                    # (3, Wp*Cout, W*Cout)
    pool = jnp.tile(jnp.eye(Cout, dtype=jnp.float32), (W, W))  # (W*C, W*C) channel pooling
    g1s = jnp.tile(g1.astype(jnp.float32), W).reshape(1, WC)
    b1s = jnp.tile(b1.astype(jnp.float32), W).reshape(1, WC)
    g2s = jnp.tile(g2.astype(jnp.float32), W).reshape(1, WC)
    b2s = jnp.tile(b2.astype(jnp.float32), W).reshape(1, WC)

    inputs = (x_slab, b1t, b2t, pool, g1s, b1s, g2s, b2s)
    io_bytes = sum(int(np.prod(a.shape)) * 4 for a in inputs) + N * H * WC * 4
    scratch_bytes = N * Hp * Wp * Cout * 4
    vmem_limit = 2 * io_bytes + scratch_bytes + (4 << 20)      # tiles + headroom

    out_slab = pl.pallas_call(
        residual_block_kernel,
        out_shape=jax.ShapeDtypeStruct((N * H, WC), jnp.float32),
        in_specs=[pl.BlockSpec(memory_space=pltpu.MemorySpace.VMEM)] * len(inputs),
        out_specs=pl.BlockSpec(memory_space=pltpu.MemorySpace.VMEM),
        scratch_shapes=[pltpu.VMEM((N, Hp, Wp * Cout), jnp.float32)],
        compiler_params=pltpu.CompilerParams(vmem_limit_bytes=int(vmem_limit)),
    )(*inputs)

    # slab -> NHWC -> NCHW
    return jnp.transpose(out_slab.reshape(N, H, W, Cout), (0, 3, 1, 2))


# ---------------- pure-JAX reference (mirrors the PyTorch forward) ----------------
def residual_block_ref(x, w1, w2, g1, b1, g2, b2):
    def conv(h, w):
        return jax.lax.conv_general_dilated(
            h, w, window_strides=(1, 1), padding=((1, 1), (1, 1)),
            dimension_numbers=("NCHW", "OIHW", "NCHW"))

    def bn(h, g, b):
        mean = jnp.mean(h, axis=(0, 2, 3), keepdims=True)
        var = jnp.mean((h - mean) ** 2, axis=(0, 2, 3), keepdims=True)
        return (h - mean) * jax.lax.rsqrt(var + EPS) * g.reshape(1, -1, 1, 1) \
               + b.reshape(1, -1, 1, 1)

    ha = jax.nn.relu(bn(conv(x, w1), g1, b1))
    ha = bn(conv(ha, w2), g2, b2)
    return jax.nn.relu(ha + x)


if __name__ == "__main__":
    key = jax.random.PRNGKey(0)
    k_x, k_w1, k_w2, k_g1, k_b1, k_g2, k_b2 = jax.random.split(key, 7)

    N, C, H, W = 2, 4, 16, 16  # channel_in == channel_out == 4
    x = jax.random.normal(k_x, (N, C, H, W), dtype=jnp.float32)

    # Conv2d(C, C, 3, padding=1, bias=False) weights; BatchNorm2d affine params
    w1 = 0.1 * jax.random.normal(k_w1, (C, C, 3, 3), dtype=jnp.float32)
    w2 = 0.1 * jax.random.normal(k_w2, (C, C, 3, 3), dtype=jnp.float32)
    g1 = 1.0 + 0.1 * jax.random.normal(k_g1, (C,), dtype=jnp.float32)
    b1 = 0.1 * jax.random.normal(k_b1, (C,), dtype=jnp.float32)
    g2 = 1.0 + 0.1 * jax.random.normal(k_g2, (C,), dtype=jnp.float32)
    b2 = 0.1 * jax.random.normal(k_b2, (C,), dtype=jnp.float32)

    out = jax.block_until_ready(residual_block(x, w1, w2, g1, b1, g2, b2))
    ref = jax.block_until_ready(residual_block_ref(x, w1, w2, g1, b1, g2, b2))

    assert out.shape == (N, C, H, W)
    err = float(jnp.max(jnp.abs(out - ref)))
    assert jnp.allclose(out, ref, atol=1e-4, rtol=1e-4), f"max abs err = {err}"

    print("KERNEL_OK")
</pallas_src>

<mosaic_0001>
module attributes {stable_mosaic.version = 11 : i64} {
  func.func @residual_block_kernel(%arg0: memref<2x16x64xf32, #tpu.memory_space<vmem>>, %arg1: memref<3x72x64xf32, #tpu.memory_space<vmem>>, %arg2: memref<3x72x64xf32, #tpu.memory_space<vmem>>, %arg3: memref<64x64xf32, #tpu.memory_space<vmem>>, %arg4: memref<1x64xf32, #tpu.memory_space<vmem>>, %arg5: memref<1x64xf32, #tpu.memory_space<vmem>>, %arg6: memref<1x64xf32, #tpu.memory_space<vmem>>, %arg7: memref<1x64xf32, #tpu.memory_space<vmem>>, %arg8: memref<32x64xf32, #tpu.memory_space<vmem>>, %arg9: memref<2x18x72xf32, #tpu.memory_space<vmem>>) attributes {dimension_semantics = [], scalar_prefetch = 0 : i64, scratch_operands = 1 : i64, tpu.core_type = #tpu.core_type<tc>} {
    %cst = arith.constant 0.000000e+00 : f32
    %0 = vector.broadcast %cst : f32 to vector<2x1x72xf32>
    %c0 = arith.constant 0 : index
    %c0_0 = arith.constant 0 : index
    %c0_1 = arith.constant 0 : index
    %1 = vector.load %arg9[%c0, %c0_0, %c0_1] : memref<2x18x72xf32, #tpu.memory_space<vmem>>, vector<2x1x72xf32>
    tpu.vector_store %arg9[%c0, %c0_0, %c0_1], %0 {strides = array<i32>} : memref<2x18x72xf32, #tpu.memory_space<vmem>>, vector<2x1x72xf32>,
    %cst_2 = arith.constant 0.000000e+00 : f32
    %2 = vector.broadcast %cst_2 : f32 to vector<2x1x72xf32>
    %c0_3 = arith.constant 0 : index
    %c17 = arith.constant 17 : index
    %c0_4 = arith.constant 0 : index
    %3 = vector.load %arg9[%c0_3, %c17, %c0_4] : memref<2x18x72xf32, #tpu.memory_space<vmem>>, vector<2x1x72xf32>
    tpu.vector_store %arg9[%c0_3, %c17, %c0_4], %2 {strides = array<i32>} : memref<2x18x72xf32, #tpu.memory_space<vmem>>, vector<2x1x72xf32>,
    %cst_5 = arith.constant 0.000000e+00 : f32
    %4 = vector.broadcast %cst_5 : f32 to vector<2x18x4xf32>
    %c0_6 = arith.constant 0 : index
    %c0_7 = arith.constant 0 : index
    %c0_8 = arith.constant 0 : index
    %5 = vector.load %arg9[%c0_6, %c0_7, %c0_8] : memref<2x18x72xf32, #tpu.memory_space<vmem>>, vector<2x18x4xf32>
    tpu.vector_store %arg9[%c0_6, %c0_7, %c0_8], %4 {strides = array<i32>} : memref<2x18x72xf32, #tpu.memory_space<vmem>>, vector<2x18x4xf32>,
    %cst_9 = arith.constant 0.000000e+00 : f32
    %6 = vector.broadcast %cst_9 : f32 to vector<2x18x4xf32>
    %c0_10 = arith.constant 0 : index
    %c0_11 = arith.constant 0 : index
    %c68 = arith.constant 68 : index
    %7 = vector.load %arg9[%c0_10, %c0_11, %c68] : memref<2x18x72xf32, #tpu.memory_space<vmem>>, vector<2x18x4xf32>
    tpu.vector_store %arg9[%c0_10, %c0_11, %c68], %6 {strides = array<i32>} : memref<2x18x72xf32, #tpu.memory_space<vmem>>, vector<2x18x4xf32>,
    %c0_12 = arith.constant 0 : index
    %c0_13 = arith.constant 0 : index
    %c0_14 = arith.constant 0 : index
    %8 = vector.load %arg0[%c0_12, %c0_13, %c0_14] : memref<2x16x64xf32, #tpu.memory_space<vmem>>, vector<2x16x64xf32>
    %c0_15 = arith.constant 0 : index
    %c1 = arith.constant 1 : index
    %c4 = arith.constant 4 : index
    %9 = vector.load %arg9[%c0_15, %c1, %c4] : memref<2x18x72xf32, #tpu.memory_space<vmem>>, vector<2x16x64xf32>
    tpu.vector_store %arg9[%c0_15, %c1, %c4], %8 {strides = array<i32>} : memref<2x18x72xf32, #tpu.memory_space<vmem>>, vector<2x16x64xf32>,
    %cst_16 = arith.constant 0.000000e+00 : f32
    %10 = vector.broadcast %cst_16 : f32 to vector<32x64xf32>
    %c0_17 = arith.constant 0 : index
    %c0_18 = arith.constant 0 : index
    %c0_19 = arith.constant 0 : index
    %11 = vector.load %arg9[%c0_17, %c0_18, %c0_19] : memref<2x18x72xf32, #tpu.memory_space<vmem>>, vector<2x16x72xf32>
    %12 = vector.shape_cast %11 : vector<2x16x72xf32> to vector<32x72xf32>
    %c0_20 = arith.constant 0 : index
    %c0_21 = arith.constant 0 : index
    %c0_22 = arith.constant 0 : index
    %13 = vector.load %arg1[%c0_20, %c0_21, %c0_22] : memref<3x72x64xf32, #tpu.memory_space<vmem>>, vector<1x72x64xf32>
    %14 = vector.shape_cast %13 : vector<1x72x64xf32> to vector<72x64xf32>
    %cst_23 = arith.constant dense<0.000000e+00> : vector<32x64xf32>
    %15 = tpu.matmul %12, %14, %cst_23 {dimension_numbers = #tpu.dot_dimension_numbers<[1], [0], [0], [1], [0, 0, 1, 1], [], []>} : vector<32x72xf32>, vector<72x64xf32>, vector<32x64xf32> -> vector<32x64xf32>
    %16 = arith.addf %10, %15 : vector<32x64xf32>
    %c0_24 = arith.constant 0 : index
    %c1_25 = arith.constant 1 : index
    %c0_26 = arith.constant 0 : index
    %17 = vector.load %arg9[%c0_24, %c1_25, %c0_26] : memref<2x18x72xf32, #tpu.memory_space<vmem>>, vector<2x16x72xf32>
    %18 = vector.shape_cast %17 : vector<2x16x72xf32> to vector<32x72xf32>
    %c1_27 = arith.constant 1 : index
    %c0_28 = arith.constant 0 : index
    %c0_29 = arith.constant 0 : index
    %19 = vector.load %arg1[%c1_27, %c0_28, %c0_29] : memref<3x72x64xf32, #tpu.memory_space<vmem>>, vector<1x72x64xf32>
    %20 = vector.shape_cast %19 : vector<1x72x64xf32> to vector<72x64xf32>
    %cst_30 = arith.constant dense<0.000000e+00> : vector<32x64xf32>
    %21 = tpu.matmul %18, %20, %cst_30 {dimension_numbers = #tpu.dot_dimension_numbers<[1], [0], [0], [1], [0, 0, 1, 1], [], []>} : vector<32x72xf32>, vector<72x64xf32>, vector<32x64xf32> -> vector<32x64xf32>
    %22 = arith.addf %16, %21 : vector<32x64xf32>
    %c0_31 = arith.constant 0 : index
    %c2 = arith.constant 2 : index
    %c0_32 = arith.constant 0 : index
    %23 = vector.load %arg9[%c0_31, %c2, %c0_32] : memref<2x18x72xf32, #tpu.memory_space<vmem>>, vector<2x16x72xf32>
    %24 = vector.shape_cast %23 : vector<2x16x72xf32> to vector<32x72xf32>
    %c2_33 = arith.constant 2 : index
    %c0_34 = arith.constant 0 : index
    %c0_35 = arith.constant 0 : index
    %25 = vector.load %arg1[%c2_33, %c0_34, %c0_35] : memref<3x72x64xf32, #tpu.memory_space<vmem>>, vector<1x72x64xf32>
    %26 = vector.shape_cast %25 : vector<1x72x64xf32> to vector<72x64xf32>
    %cst_36 = arith.constant dense<0.000000e+00> : vector<32x64xf32>
    %27 = tpu.matmul %24, %26, %cst_36 {dimension_numbers = #tpu.dot_dimension_numbers<[1], [0], [0], [1], [0, 0, 1, 1], [], []>} : vector<32x72xf32>, vector<72x64xf32>, vector<32x64xf32> -> vector<32x64xf32>
    %28 = arith.addf %22, %27 : vector<32x64xf32>
    %cst_37 = arith.constant dense<0.000000e+00> : vector<64xf32>
    %29 = vector.multi_reduction <add>, %28, %cst_37 [0] : vector<32x64xf32> to vector<64xf32>
    %30 = vector.shape_cast %29 : vector<64xf32> to vector<1x64xf32>
    %31 = arith.mulf %28, %28 : vector<32x64xf32>
    %cst_38 = arith.constant dense<0.000000e+00> : vector<64xf32>
    %32 = vector.multi_reduction <add>, %31, %cst_38 [0] : vector<32x64xf32> to vector<64xf32>
    %33 = vector.shape_cast %32 : vector<64xf32> to vector<1x64xf32>
    %c0_39 = arith.constant 0 : index
    %c0_40 = arith.constant 0 : index
    %34 = vector.load %arg3[%c0_39, %c0_40] : memref<64x64xf32, #tpu.memory_space<vmem>>, vector<64x64xf32>
    %cst_41 = arith.constant dense<0.000000e+00> : vector<1x64xf32>
    %35 = tpu.matmul %30, %34, %cst_41 {dimension_numbers = #tpu.dot_dimension_numbers<[1], [0], [0], [1], [0, 0, 1, 1], [], []>} : vector<1x64xf32>, vector<64x64xf32>, vector<1x64xf32> -> vector<1x64xf32>
    %cst_42 = arith.constant 0.001953125 : f32
    %36 = vector.broadcast %cst_42 : f32 to vector<1x64xf32>
    %37 = arith.mulf %35, %36 : vector<1x64xf32>
    %c0_43 = arith.constant 0 : index
    %c0_44 = arith.constant 0 : index
    %38 = vector.load %arg3[%c0_43, %c0_44] : memref<64x64xf32, #tpu.memory_space<vmem>>, vector<64x64xf32>
    %cst_45 = arith.constant dense<0.000000e+00> : vector<1x64xf32>
    %39 = tpu.matmul %33, %38, %cst_45 {dimension_numbers = #tpu.dot_dimension_numbers<[1], [0], [0], [1], [0, 0, 1, 1], [], []>} : vector<1x64xf32>, vector<64x64xf32>, vector<1x64xf32> -> vector<1x64xf32>
    %cst_46 = arith.constant 0.001953125 : f32
    %40 = vector.broadcast %cst_46 : f32 to vector<1x64xf32>
    %41 = arith.mulf %39, %40 : vector<1x64xf32>
    %42 = arith.mulf %37, %37 : vector<1x64xf32>
    %43 = arith.subf %41, %42 : vector<1x64xf32>
    %c0_47 = arith.constant 0 : index
    %c0_48 = arith.constant 0 : index
    %44 = vector.load %arg4[%c0_47, %c0_48] : memref<1x64xf32, #tpu.memory_space<vmem>>, vector<1x64xf32>
    %cst_49 = arith.constant 9.99999974E-6 : f32
    %45 = vector.broadcast %cst_49 : f32 to vector<1x64xf32>
    %46 = arith.addf %43, %45 : vector<1x64xf32>
    %47 = math.rsqrt %46 : vector<1x64xf32>
    %48 = arith.mulf %44, %47 : vector<1x64xf32>
    %c0_50 = arith.constant 0 : index
    %c0_51 = arith.constant 0 : index
    %49 = vector.load %arg5[%c0_50, %c0_51] : memref<1x64xf32, #tpu.memory_space<vmem>>, vector<1x64xf32>
    %50 = arith.mulf %37, %48 : vector<1x64xf32>
    %51 = arith.subf %49, %50 : vector<1x64xf32>
    %52 = vector.broadcast %48 : vector<1x64xf32> to vector<32x64xf32>
    %53 = arith.mulf %28, %52 : vector<32x64xf32>
    %54 = vector.broadcast %51 : vector<1x64xf32> to vector<32x64xf32>
    %55 = arith.addf %53, %54 : vector<32x64xf32>
    %cst_52 = arith.constant 0.000000e+00 : f32
    %56 = vector.broadcast %cst_52 : f32 to vector<32x64xf32>
    %57 = arith.maximumf %55, %56 : vector<32x64xf32>
    %58 = vector.shape_cast %57 : vector<32x64xf32> to vector<2x16x64xf32>
    %c0_53 = arith.constant 0 : index
    %c1_54 = arith.constant 1 : index
    %c4_55 = arith.constant 4 : index
    %59 = vector.load %arg9[%c0_53, %c1_54, %c4_55] : memref<2x18x72xf32, #tpu.memory_space<vmem>>, vector<2x16x64xf32>
    tpu.vector_store %arg9[%c0_53, %c1_54, %c4_55], %58 {strides = array<i32>} : memref<2x18x72xf32, #tpu.memory_space<vmem>>, vector<2x16x64xf32>,
    %cst_56 = arith.constant 0.000000e+00 : f32
    %60 = vector.broadcast %cst_56 : f32 to vector<32x64xf32>
    %c0_57 = arith.constant 0 : index
    %c0_58 = arith.constant 0 : index
    %c0_59 = arith.constant 0 : index
    %61 = vector.load %arg9[%c0_57, %c0_58, %c0_59] : memref<2x18x72xf32, #tpu.memory_space<vmem>>, vector<2x16x72xf32>
    %62 = vector.shape_cast %61 : vector<2x16x72xf32> to vector<32x72xf32>
    %c0_60 = arith.constant 0 : index
    %c0_61 = arith.constant 0 : index
    %c0_62 = arith.constant 0 : index
    %63 = vector.load %arg2[%c0_60, %c0_61, %c0_62] : memref<3x72x64xf32, #tpu.memory_space<vmem>>, vector<1x72x64xf32>
    %64 = vector.shape_cast %63 : vector<1x72x64xf32> to vector<72x64xf32>
    %cst_63 = arith.constant dense<0.000000e+00> : vector<32x64xf32>
    %65 = tpu.matmul %62, %64, %cst_63 {dimension_numbers = #tpu.dot_dimension_numbers<[1], [0], [0], [1], [0, 0, 1, 1], [], []>} : vector<32x72xf32>, vector<72x64xf32>, vector<32x64xf32> -> vector<32x64xf32>
    %66 = arith.addf %60, %65 : vector<32x64xf32>
    %c0_64 = arith.constant 0 : index
    %c1_65 = arith.constant 1 : index
    %c0_66 = arith.constant 0 : index
    %67 = vector.load %arg9[%c0_64, %c1_65, %c0_66] : memref<2x18x72xf32, #tpu.memory_space<vmem>>, vector<2x16x72xf32>
    %68 = vector.shape_cast %67 : vector<2x16x72xf32> to vector<32x72xf32>
    %c1_67 = arith.constant 1 : index
    %c0_68 = arith.constant 0 : index
    %c0_69 = arith.constant 0 : index
    %69 = vector.load %arg2[%c1_67, %c0_68, %c0_69] : memref<3x72x64xf32, #tpu.memory_space<vmem>>, vector<1x72x64xf32>
    %70 = vector.shape_cast %69 : vector<1x72x64xf32> to vector<72x64xf32>
    %cst_70 = arith.constant dense<0.000000e+00> : vector<32x64xf32>
    %71 = tpu.matmul %68, %70, %cst_70 {dimension_numbers = #tpu.dot_dimension_numbers<[1], [0], [0], [1], [0, 0, 1, 1], [], []>} : vector<32x72xf32>, vector<72x64xf32>, vector<32x64xf32> -> vector<32x64xf32>
    %72 = arith.addf %66, %71 : vector<32x64xf32>
    %c0_71 = arith.constant 0 : index
    %c2_72 = arith.constant 2 : index
    %c0_73 = arith.constant 0 : index
    %73 = vector.load %arg9[%c0_71, %c2_72, %c0_73] : memref<2x18x72xf32, #tpu.memory_space<vmem>>, vector<2x16x72xf32>
    %74 = vector.shape_cast %73 : vector<2x16x72xf32> to vector<32x72xf32>
    %c2_74 = arith.constant 2 : index
    %c0_75 = arith.constant 0 : index
    %c0_76 = arith.constant 0 : index
    %75 = vector.load %arg2[%c2_74, %c0_75, %c0_76] : memref<3x72x64xf32, #tpu.memory_space<vmem>>, vector<1x72x64xf32>
    %76 = vector.shape_cast %75 : vector<1x72x64xf32> to vector<72x64xf32>
    %cst_77 = arith.constant dense<0.000000e+00> : vector<32x64xf32>
    %77 = tpu.matmul %74, %76, %cst_77 {dimension_numbers = #tpu.dot_dimension_numbers<[1], [0], [0], [1], [0, 0, 1, 1], [], []>} : vector<32x72xf32>, vector<72x64xf32>, vector<32x64xf32> -> vector<32x64xf32>
    %78 = arith.addf %72, %77 : vector<32x64xf32>
    %cst_78 = arith.constant dense<0.000000e+00> : vector<64xf32>
    %79 = vector.multi_reduction <add>, %78, %cst_78 [0] : vector<32x64xf32> to vector<64xf32>
    %80 = vector.shape_cast %79 : vector<64xf32> to vector<1x64xf32>
    %81 = arith.mulf %78, %78 : vector<32x64xf32>
    %cst_79 = arith.constant dense<0.000000e+00> : vector<64xf32>
    %82 = vector.multi_reduction <add>, %81, %cst_79 [0] : vector<32x64xf32> to vector<64xf32>
    %83 = vector.shape_cast %82 : vector<64xf32> to vector<1x64xf32>
    %c0_80 = arith.constant 0 : index
    %c0_81 = arith.constant 0 : index
    %84 = vector.load %arg3[%c0_80, %c0_81] : memref<64x64xf32, #tpu.memory_space<vmem>>, vector<64x64xf32>
    %cst_82 = arith.constant dense<0.000000e+00> : vector<1x64xf32>
    %85 = tpu.matmul %80, %84, %cst_82 {dimension_numbers = #tpu.dot_dimension_numbers<[1], [0], [0], [1], [0, 0, 1, 1], [], []>} : vector<1x64xf32>, vector<64x64xf32>, vector<1x64xf32> -> vector<1x64xf32>
    %cst_83 = arith.constant 0.001953125 : f32
    %86 = vector.broadcast %cst_83 : f32 to vector<1x64xf32>
    %87 = arith.mulf %85, %86 : vector<1x64xf32>
    %c0_84 = arith.constant 0 : index
    %c0_85 = arith.constant 0 : index
    %88 = vector.load %arg3[%c0_84, %c0_85] : memref<64x64xf32, #tpu.memory_space<vmem>>, vector<64x64xf32>
    %cst_86 = arith.constant dense<0.000000e+00> : vector<1x64xf32>
    %89 = tpu.matmul %83, %88, %cst_86 {dimension_numbers = #tpu.dot_dimension_numbers<[1], [0], [0], [1], [0, 0, 1, 1], [], []>} : vector<1x64xf32>, vector<64x64xf32>, vector<1x64xf32> -> vector<1x64xf32>
    %cst_87 = arith.constant 0.001953125 : f32
    %90 = vector.broadcast %cst_87 : f32 to vector<1x64xf32>
    %91 = arith.mulf %89, %90 : vector<1x64xf32>
    %92 = arith.mulf %87, %87 : vector<1x64xf32>
    %93 = arith.subf %91, %92 : vector<1x64xf32>
    %c0_88 = arith.constant 0 : index
    %c0_89 = arith.constant 0 : index
    %94 = vector.load %arg6[%c0_88, %c0_89] : memref<1x64xf32, #tpu.memory_space<vmem>>, vector<1x64xf32>
    %cst_90 = arith.constant 9.99999974E-6 : f32
    %95 = vector.broadcast %cst_90 : f32 to vector<1x64xf32>
    %96 = arith.addf %93, %95 : vector<1x64xf32>
    %97 = math.rsqrt %96 : vector<1x64xf32>
    %98 = arith.mulf %94, %97 : vector<1x64xf32>
    %c0_91 = arith.constant 0 : index
    %c0_92 = arith.constant 0 : index
    %99 = vector.load %arg7[%c0_91, %c0_92] : memref<1x64xf32, #tpu.memory_space<vmem>>, vector<1x64xf32>
    %100 = arith.mulf %87, %98 : vector<1x64xf32>
    %101 = arith.subf %99, %100 : vector<1x64xf32>
    %102 = vector.broadcast %98 : vector<1x64xf32> to vector<32x64xf32>
    %103 = arith.mulf %78, %102 : vector<32x64xf32>
    %104 = vector.broadcast %101 : vector<1x64xf32> to vector<32x64xf32>
    %105 = arith.addf %103, %104 : vector<32x64xf32>
    %c0_93 = arith.constant 0 : index
    %c0_94 = arith.constant 0 : index
    %c0_95 = arith.constant 0 : index
    %106 = vector.load %arg0[%c0_93, %c0_94, %c0_95] : memref<2x16x64xf32, #tpu.memory_space<vmem>>, vector<2x16x64xf32>
    %107 = vector.shape_cast %106 : vector<2x16x64xf32> to vector<32x64xf32>
    %108 = arith.addf %105, %107 : vector<32x64xf32>
    %cst_96 = arith.constant 0.000000e+00 : f32
    %109 = vector.broadcast %cst_96 : f32 to vector<32x64xf32>
    %110 = arith.maximumf %108, %109 : vector<32x64xf32>
    %c0_97 = arith.constant 0 : index
    %c0_98 = arith.constant 0 : index
    %111 = vector.load %arg8[%c0_97, %c0_98] : memref<32x64xf32, #tpu.memory_space<vmem>>, vector<32x64xf32>
    tpu.vector_store %arg8[%c0_97, %c0_98], %110 {strides = array<i32>} : memref<32x64xf32, #tpu.memory_space<vmem>>, vector<32x64xf32>,
    return
  }
}

</mosaic_0001>

<llo_original>
// kernel: tpu_custom_call.1
$region0: #{tpu_custom_call.1}
  #allocation0 [shape = 'u32[]', space=smem, size = 0x4, offset = 0x4, fixed_abs, tag = 'smem constant byte address 0x4 - core index']
  #allocation1 [shape = 'u32[144,128]{1,0:T(1,128)}', space=vmem, size = 0x12000, scoped, tag = 'internal scratch']
  #allocation2 [shape = 'f32[2,18,72]{2,1,0:T(8,128)}', space=vmem, size = 0x6000, scoped, tag = 'scratch operand']
  %s0 = inlined_call_operand.vmem [shape: f32[2,16,64], index: 0, kind: input, shape index: {}]
  %s1 = inlined_call_operand.vmem [shape: f32[3,72,64], index: 1, kind: input, shape index: {}]
  %s2 = inlined_call_operand.vmem [shape: f32[3,72,64], index: 2, kind: input, shape index: {}]
  %s3 = inlined_call_operand.vmem [shape: f32[64,64], index: 3, kind: input, shape index: {}]
  %s4 = inlined_call_operand.vmem [shape: f32[1,64], index: 4, kind: input, shape index: {}]
  %s5 = inlined_call_operand.vmem [shape: f32[1,64], index: 5, kind: input, shape index: {}]
  %s6 = inlined_call_operand.vmem [shape: f32[1,64], index: 6, kind: input, shape index: {}]
  %s7 = inlined_call_operand.vmem [shape: f32[1,64], index: 7, kind: input, shape index: {}]
  %s8 = inlined_call_operand.hbm [shape: f32[32,64], index: 8, kind: output, shape index: {}]
  %s9 = sld [smem:[#allocation0]]
  $region42: #{tpu_custom_call.1} parent=0
    _
  %s11 = ssub.s32 1, %s9
  %s12 = scalar_select 0, %s11, %s9
  $region1: #{tpu_custom_call.1} parent=0
    #allocation3 [shape = 'u8[16384]{0}', space=vmem, size = 0x4000, scoped, tag = 'output window, operand 0, single buffered']
    #allocation4 [shape = 's32[1]{0}', space=sflag, size = 0x4, scoped, tag = 'scoped memory for tpu_custom_call.1']
    %13 = vsyncpa [#allocation4], 0
    // Predicated region
    $region2: #{tpu_custom_call.1} parent=1 // pred_check
      _
    $region3: #{tpu_custom_call.1} parent=1 // pred_check_branch
      %15 = sbr.rel (0) target = $region5
    $region4: #{tpu_custom_call.1} parent=1 // pred_region
      _
    $region5: #{tpu_custom_call.1} parent=1 // pred_fallthru
      _
    // Predicated region
    $region6: #{tpu_custom_call.1} parent=1 // pred_check
      _
    $region7: #{tpu_custom_call.1} parent=1 // pred_check_branch
      %17 = sbr.rel (0) target = $region9
    $region8: #{tpu_custom_call.1} parent=1 // pred_region
      _
    $region9: #{tpu_custom_call.1} parent=1 // pred_fallthru
      _
    // Predicated region
    $region10: #{tpu_custom_call.1} parent=1 // pred_check
      _
    $region11: #{tpu_custom_call.1} parent=1 // pred_check_branch
      %19 = sbr.rel (0) target = $region13
    $region12: #{tpu_custom_call.1} parent=1 // pred_region
      _
    $region13: #{tpu_custom_call.1} parent=1 // pred_fallthru
      _
    // Predicated region
    $region14: #{tpu_custom_call.1} parent=1 // pred_check
      _
    $region15: #{tpu_custom_call.1} parent=1 // pred_check_branch
      %21 = sbr.rel (0) target = $region17
    $region16: #{tpu_custom_call.1} parent=1 // pred_region
      _
    $region17: #{tpu_custom_call.1} parent=1 // pred_fallthru
      _
    // Predicated region
    $region18: #{tpu_custom_call.1} parent=1 // pred_check
      _
    $region19: #{tpu_custom_call.1} parent=1 // pred_check_branch
      %23 = sbr.rel (0) target = $region21
    $region20: #{tpu_custom_call.1} parent=1 // pred_region
      _
    $region21: #{tpu_custom_call.1} parent=1 // pred_fallthru
      _
    // Predicated region
    $region22: #{tpu_custom_call.1} parent=1 // pred_check
      _
    $region23: #{tpu_custom_call.1} parent=1 // pred_check_branch
      %25 = sbr.rel (0) target = $region25
    $region24: #{tpu_custom_call.1} parent=1 // pred_region
      _
    $region25: #{tpu_custom_call.1} parent=1 // pred_fallthru
      _
    // Predicated region
    $region26: #{tpu_custom_call.1} parent=1 // pred_check
      _
    $region27: #{tpu_custom_call.1} parent=1 // pred_check_branch
      %27 = sbr.rel (0) target = $region29
    $region28: #{tpu_custom_call.1} parent=1 // pred_region
      _
    $region29: #{tpu_custom_call.1} parent=1 // pred_fallthru
      _
    // Predicated region
    $region30: #{tpu_custom_call.1} parent=1 // pred_check
      _
    $region31: #{tpu_custom_call.1} parent=1 // pred_check_branch
      %29 = sbr.rel (0) target = $region33
    $region32: #{tpu_custom_call.1} parent=1 // pred_region
      _
    $region33: #{tpu_custom_call.1} parent=1 // pred_fallthru
      _
    %vm30 = vcmask 581632
    %31 = vst.msk [vmem:[#allocation2] sm:$0x1] %vm30, 0.0
    %32 = vst.msk [vmem:[#allocation2 + $0x18] sm:$0x1] %vm30, 0.0
    %33 = vst.msk [vmem:[#allocation2 + $0x11] sm:$0x1] %vm30, 0.0
    %34 = vst.msk [vmem:[#allocation2 + $0x29] sm:$0x1] %vm30, 0.0
    %vm35 = vcmask 31744
    %36 = vst.msk [vmem:[#allocation2] sm:$0xff] %vm35, 0.0
    %37 = vst.msk [vmem:[#allocation2 + $0x8] sm:$0xff] %vm35, 0.0
    %vm38 = vcmask 25600
    %39 = vst.msk [vmem:[#allocation2 + $0x10] sm:$0x3] %vm38, 0.0
    %40 = vst.msk [vmem:[#allocation2 + $0x18] sm:$0xff] %vm35, 0.0
    %41 = vst.msk [vmem:[#allocation2 + $0x20] sm:$0xff] %vm35, 0.0
    %42 = vst.msk [vmem:[#allocation2 + $0x28] sm:$0x3] %vm38, 0.0
    %vm43 = vcmask 589344
    %44 = vst.msk [vmem:[#allocation2] sm:$0xff] %vm43, 0.0
    %45 = vst.msk [vmem:[#allocation2 + $0x8] sm:$0xff] %vm43, 0.0
    %vm46 = vcmask 583200
    %47 = vst.msk [vmem:[#allocation2 + $0x10] sm:$0x3] %vm46, 0.0
    %48 = vst.msk [vmem:[#allocation2 + $0x18] sm:$0xff] %vm43, 0.0
    %49 = vst.msk [vmem:[#allocation2 + $0x20] sm:$0xff] %vm43, 0.0
    %50 = vst.msk [vmem:[#allocation2 + $0x28] sm:$0x3] %vm46, 0.0
    %v51 = vld [vmem:[%s0] sm:$0xff]
    %v52 = vld [vmem:[%s0 + $0x8] sm:$0xff]
    %v53 = vld [vmem:[%s0 + $0x10] sm:$0xff]
    %v54 = vld [vmem:[%s0 + $0x18] sm:$0xff]
    %59 = vrot.lane.b32.xlu0 %v51, 4
    %v60 = vpop.permute.xlu0 %59
    %61 = vrot.lane.b32.xlu0 %v52, 4
    %v62 = vpop.permute.xlu0 %61
    %63 = vrot.lane.b32.xlu0 %v53, 4
    %v64 = vpop.permute.xlu0 %63
    %65 = vrot.lane.b32.xlu0 %v54, 4
    %v66 = vpop.permute.xlu0 %65
    %vm71 = vcmask 556064
    %72 = vst.msk [vmem:[#allocation2 + $0x1] sm:$0xff] %vm71, %v60
    %73 = vst.msk [vmem:[#allocation2 + $0x9] sm:$0xff] %vm71, %v62
    %74 = vst.msk [vmem:[#allocation2 + $0x19] sm:$0xff] %vm71, %v64
    %75 = vst.msk [vmem:[#allocation2 + $0x21] sm:$0xff] %vm71, %v66
    %v76 = vld [vmem:[#allocation2] sm:$0xff]
    %v77 = vld [vmem:[#allocation2 + $0x8] sm:$0xff]
    %v78 = vld [vmem:[#allocation2 + $0x18] sm:$0xff]
    %v79 = vld [vmem:[#allocation2 + $0x20] sm:$0xff]
    %v80 = vld [vmem:[%s1] sm:$0xff]
    %v81 = vld [vmem:[%s1 + $0x8] sm:$0xff]
    %v82 = vld [vmem:[%s1 + $0x10] sm:$0xff]
    %v83 = vld [vmem:[%s1 + $0x18] sm:$0xff]
    %v84 = vld [vmem:[%s1 + $0x20] sm:$0xff]
    %v85 = vld [vmem:[%s1 + $0x28] sm:$0xff]
    %v86 = vld [vmem:[%s1 + $0x30] sm:$0xff]
    %v87 = vld [vmem:[%s1 + $0x38] sm:$0xff]
    %v88 = vld [vmem:[%s1 + $0x40] sm:$0xff]
    %v89 = vld [vmem:[#allocation2 + $0x1] sm:$0xff]
    %v90 = vld [vmem:[#allocation2 + $0x9] sm:$0xff]
    %v91 = vld [vmem:[#allocation2 + $0x19] sm:$0xff]
    %v92 = vld [vmem:[#allocation2 + $0x21] sm:$0xff]
    %s93 = scalar_lea.vmem %s1, 72
    %v94 = vld [vmem:[%s93] sm:$0xff]
    %v95 = vld [vmem:[%s93 + $0x8] sm:$0xff]
    %v96 = vld [vmem:[%s93 + $0x10] sm:$0xff]
    %v97 = vld [vmem:[%s93 + $0x18] sm:$0xff]
    %v98 = vld [vmem:[%s93 + $0x20] sm:$0xff]
    %v99 = vld [vmem:[%s93 + $0x28] sm:$0xff]
    %v100 = vld [vmem:[%s93 + $0x30] sm:$0xff]
    %v101 = vld [vmem:[%s93 + $0x38] sm:$0xff]
    %v102 = vld [vmem:[%s93 + $0x40] sm:$0xff]
    %vm103 = vcmask 588800
    %v105 = vsel %vm103, %v89, 0
    %v108 = vsel %vm103, %v90, 0
    %v111 = vsel %vm103, %v91, 0
    %v114 = vsel %vm103, %v92, 0
    %116 = vmatprep.subr.mxu0 0.0
    %117 = vmatpush1.msra.mxu0 %v94
    %118 = vmatprep.subr.mxu0 0.0
    %119 = vmatpush1.msra.mxu0 %v95
    %120 = vmatprep.subr.mxu0 0.0
    %121 = vmatpush1.msra.mxu0 %v96
    %122 = vmatprep.subr.mxu0 0.0
    %123 = vmatpush1.msra.mxu0 %v97
    %124 = vmatprep.subr.mxu0 0.0
    %125 = vmatpush1.msra.mxu0 %v98
    %126 = vmatprep.subr.mxu0 0.0
    %127 = vmatpush1.msra.mxu0 %v99
    %128 = vmatprep.subr.mxu0 0.0
    %129 = vmatpush1.msra.mxu0 %v100
    %130 = vmatprep.subr.mxu0 0.0
    %131 = vmatpush1.msra.mxu0 %v101
    %132 = vmatprep.subr.mxu0 0.0
    %133 = vmatpush1.msra.mxu0 %v102
    %134 = vmatprep.subr.mxu0 0.0
    %135 = vmatpush1.msra.mxu0 0.0
    %136 = vmatprep.subr.mxu0 0.0
    %137 = vmatpush1.msra.mxu0 0.0
    %138 = vmatprep.subr.mxu0 0.0
    %139 = vmatpush1.msra.mxu0 0.0
    %140 = vmatprep.subr.mxu0 0.0
    %141 = vmatpush1.msra.mxu0 0.0
    %142 = vmatprep.subr.mxu0 0.0
    %143 = vmatpush1.msra.mxu0 0.0
    %144 = vmatprep.subr.mxu0 0.0
    %145 = vmatpush1.msra.mxu0 0.0
    %146 = vmatprep.subr.mxu0 0.0
    %147 = vmatpush1.msra.mxu0 0.0
    %148 = vmatprep.subr.mxu0 0.0
    %149 = vmatpush1.msra.mxu0 0.0
    %150 = vmatprep.subr.mxu0 0.0
    %151 = vmatpush1.msra.mxu0 0.0
    %152 = vmatprep.subr.mxu0 0.0
    %153 = vmatpush1.msra.mxu0 0.0
    %154 = vmatprep.subr.mxu0 0.0
    %155 = vmatpush1.msra.mxu0 0.0
    %156 = vmatprep.subr.mxu0 0.0
    %157 = vmatpush1.msra.mxu0 0.0
    %158 = vmatprep.subr.mxu0 0.0
    %159 = vmatpush1.msra.mxu0 0.0
    %160 = vmatprep.subr.mxu0 0.0
    %161 = vmatpush1.msra.mxu0 0.0
    %162 = vmatprep.subr.mxu0 0.0
    %163 = vmatpush1.msra.mxu0 0.0
    %164 = vmatprep.subr.mxu0 0.0
    %165 = vmatpush1.msra.mxu0 0.0
    %166 = vmatprep.subr.mxu0 0.0
    %167 = vmatpush1.msra.mxu0 0.0
    %168 = vmatprep.subr.mxu0 0.0
    %169 = vmatpush1.msra.mxu0 0.0
    %170 = vmatprep.subr.mxu0 0.0
    %171 = vmatpush1.msra.mxu0 0.0
    %172 = vmatprep.subr.mxu0 0.0
    %173 = vmatpush1.msra.mxu0 0.0
    %174 = vmatprep.subr.mxu0 0.0
    %175 = vmatpush1.msra.mxu0 0.0
    %176 = vmatprep.subr.mxu0 0.0
    %177 = vmatpush1.msra.mxu0 0.0
    %178 = vmatprep.subr.mxu0 0.0
    %179 = vmatpush1.msra.mxu0 0.0
    %180 = vmatprep.mubr.f32.mxu0 0.0
    %181 = vmatmul.mubr.f32.gmra.mrb[0].mxu0 %v105
    %v182 = vpop.f32.mrb[0].mxu0
    %v183 = vadd.f32 0.0, %v182
    %v184 = vpop.f32.mrb[0].mxu0
    %185 = vmatprep.mubr.f32.mxu0 0.0
    %186 = vmatmul.mubr.f32.gmra.mrb[0].mxu0 %v108
    %v187 = vpop.f32.mrb[0].mxu0
    %v188 = vadd.f32 0.0, %v187
    %v189 = vpop.f32.mrb[0].mxu0
    %190 = vmatprep.mubr.f32.mxu0 0.0
    %191 = vmatmul.mubr.f32.gmra.mrb[0].mxu0 %v111
    %v192 = vpop.f32.mrb[0].mxu0
    %v193 = vadd.f32 0.0, %v192
    %v194 = vpop.f32.mrb[0].mxu0
    %195 = vmatprep.mubr.f32.mxu0 0.0
    %196 = vmatmul.mubr.f32.gmra.mrb[0].mxu0 %v114
    %v197 = vpop.f32.mrb[0].mxu0
    %v198 = vadd.f32 0.0, %v197
    %v199 = vpop.f32.mrb[0].mxu0
    %200 = vdwg.mxu0
    %v202 = vsel %vm103, %v76, 0
    %v205 = vsel %vm103, %v77, 0
    %v208 = vsel %vm103, %v78, 0
    %v211 = vsel %vm103, %v79, 0
    %213 = vmatprep.subr.mxu0 0.0
    %214 = vmatpush1.msra.mxu0 %v80
    %215 = vmatprep.subr.mxu0 0.0
    %216 = vmatpush1.msra.mxu0 %v81
    %217 = vmatprep.subr.mxu0 0.0
    %218 = vmatpush1.msra.mxu0 %v82
    %219 = vmatprep.subr.mxu0 0.0
    %220 = vmatpush1.msra.mxu0 %v83
    %221 = vmatprep.subr.mxu0 0.0
    %222 = vmatpush1.msra.mxu0 %v84
    %223 = vmatprep.subr.mxu0 0.0
    %224 = vmatpush1.msra.mxu0 %v85
    %225 = vmatprep.subr.mxu0 0.0
    %226 = vmatpush1.msra.mxu0 %v86
    %227 = vmatprep.subr.mxu0 0.0
    %228 = vmatpush1.msra.mxu0 %v87
    %229 = vmatprep.subr.mxu0 0.0
    %230 = vmatpush1.msra.mxu0 %v88
    %231 = vmatprep.subr.mxu0 0.0
    %232 = vmatpush1.msra.mxu0 0.0
    %233 = vmatprep.subr.mxu0 0.0
    %234 = vmatpush1.msra.mxu0 0.0
    %235 = vmatprep.subr.mxu0 0.0
    %236 = vmatpush1.msra.mxu0 0.0
    %237 = vmatprep.subr.mxu0 0.0
    %238 = vmatpush1.msra.mxu0 0.0
    %239 = vmatprep.subr.mxu0 0.0
    %240 = vmatpush1.msra.mxu0 0.0
    %241 = vmatprep.subr.mxu0 0.0
    %242 = vmatpush1.msra.mxu0 0.0
    %243 = vmatprep.subr.mxu0 0.0
    %244 = vmatpush1.msra.mxu0 0.0
    %245 = vmatprep.subr.mxu0 0.0
    %246 = vmatpush1.msra.mxu0 0.0
    %247 = vmatprep.subr.mxu0 0.0
    %248 = vmatpush1.msra.mxu0 0.0
    %249 = vmatprep.subr.mxu0 0.0
    %250 = vmatpush1.msra.mxu0 0.0
    %251 = vmatprep.subr.mxu0 0.0
    %252 = vmatpush1.msra.mxu0 0.0
    %253 = vmatprep.subr.mxu0 0.0
    %254 = vmatpush1.msra.mxu0 0.0
    %255 = vmatprep.subr.mxu0 0.0
    %256 = vmatpush1.msra.mxu0 0.0
    %257 = vmatprep.subr.mxu0 0.0
    %258 = vmatpush1.msra.mxu0 0.0
    %259 = vmatprep.subr.mxu0 0.0
    %260 = vmatpush1.msra.mxu0 0.0
    %261 = vmatprep.subr.mxu0 0.0
    %262 = vmatpush1.msra.mxu0 0.0
    %263 = vmatprep.subr.mxu0 0.0
    %264 = vmatpush1.msra.mxu0 0.0
    %265 = vmatprep.subr.mxu0 0.0
    %266 = vmatpush1.msra.mxu0 0.0
    %267 = vmatprep.subr.mxu0 0.0
    %268 = vmatpush1.msra.mxu0 0.0
    %269 = vmatprep.subr.mxu0 0.0
    %270 = vmatpush1.msra.mxu0 0.0
    %271 = vmatprep.subr.mxu0 0.0
    %272 = vmatpush1.msra.mxu0 0.0
    %273 = vmatprep.subr.mxu0 0.0
    %274 = vmatpush1.msra.mxu0 0.0
    %275 = vmatprep.subr.mxu0 0.0
    %276 = vmatpush1.msra.mxu0 0.0
    %277 = vmatprep.mubr.f32.mxu0 0.0
    %278 = vmatmul.mubr.f32.gmra.mrb[0].mxu0 %v202
    %v279 = vpop.f32.mrb[0].mxu0
    %v280 = vadd.f32 %v183, %v279
    %v281 = vpop.f32.mrb[0].mxu0
    %282 = vmatprep.mubr.f32.mxu0 0.0
    %283 = vmatmul.mubr.f32.gmra.mrb[0].mxu0 %v205
    %v284 = vpop.f32.mrb[0].mxu0
    %v285 = vadd.f32 %v188, %v284
    %v286 = vpop.f32.mrb[0].mxu0
    %287 = vmatprep.mubr.f32.mxu0 0.0
    %288 = vmatmul.mubr.f32.gmra.mrb[0].mxu0 %v208
    %v289 = vpop.f32.mrb[0].mxu0
    %v290 = vadd.f32 %v193, %v289
    %v291 = vpop.f32.mrb[0].mxu0
    %292 = vmatprep.mubr.f32.mxu0 0.0
    %293 = vmatmul.mubr.f32.gmra.mrb[0].mxu0 %v211
    %v294 = vpop.f32.mrb[0].mxu0
    %v295 = vadd.f32 %v198, %v294
    %v296 = vpop.f32.mrb[0].mxu0
    %297 = vdwg.mxu0
    %v298 = vld [vmem:[#allocation2 + $0x2] sm:$0xff]
    %v299 = vld [vmem:[#allocation2 + $0xa] sm:$0xff]
    %v300 = vld [vmem:[#allocation2 + $0x1a] sm:$0xff]
    %v301 = vld [vmem:[#allocation2 + $0x22] sm:$0xff]
    %s302 = scalar_lea.vmem %s1, 144
    %v303 = vld [vmem:[%s302] sm:$0xff]
    %v304 = vld [vmem:[%s302 + $0x8] sm:$0xff]
    %v305 = vld [vmem:[%s302 + $0x10] sm:$0xff]
    %v306 = vld [vmem:[%s302 + $0x18] sm:$0xff]
    %v307 = vld [vmem:[%s302 + $0x20] sm:$0xff]
    %v308 = vld [vmem:[%s302 + $0x28] sm:$0xff]
    %v309 = vld [vmem:[%s302 + $0x30] sm:$0xff]
    %v310 = vld [vmem:[%s302 + $0x38] sm:$0xff]
    %v311 = vld [vmem:[%s302 + $0x40] sm:$0xff]
    %v313 = vsel %vm103, %v298, 0
    %v316 = vsel %vm103, %v299, 0
    %v319 = vsel %vm103, %v300, 0
    %v322 = vsel %vm103, %v301, 0
    %324 = vmatprep.subr.mxu0 0.0
    %325 = vmatpush1.msra.mxu0 %v303
    %326 = vmatprep.subr.mxu0 0.0
    %327 = vmatpush1.msra.mxu0 %v304
    %328 = vmatprep.subr.mxu0 0.0
    %329 = vmatpush1.msra.mxu0 %v305
    %330 = vmatprep.subr.mxu0 0.0
    %331 = vmatpush1.msra.mxu0 %v306
    %332 = vmatprep.subr.mxu0 0.0
    %333 = vmatpush1.msra.mxu0 %v307
    %334 = vmatprep.subr.mxu0 0.0
    %335 = vmatpush1.msra.mxu0 %v308
    %336 = vmatprep.subr.mxu0 0.0
    %337 = vmatpush1.msra.mxu0 %v309
    %338 = vmatprep.subr.mxu0 0.0
    %339 = vmatpush1.msra.mxu0 %v310
    %340 = vmatprep.subr.mxu0 0.0
    %341 = vmatpush1.msra.mxu0 %v311
    %342 = vmatprep.subr.mxu0 0.0
    %343 = vmatpush1.msra.mxu0 0.0
    %344 = vmatprep.subr.mxu0 0.0
    %345 = vmatpush1.msra.mxu0 0.0
    %346 = vmatprep.subr.mxu0 0.0
    %347 = vmatpush1.msra.mxu0 0.0
    %348 = vmatprep.subr.mxu0 0.0
    %349 = vmatpush1.msra.mxu0 0.0
    %350 = vmatprep.subr.mxu0 0.0
    %351 = vmatpush1.msra.mxu0 0.0
    %352 = vmatprep.subr.mxu0 0.0
    %353 = vmatpush1.msra.mxu0 0.0
    %354 = vmatprep.subr.mxu0 0.0
    %355 = vmatpush1.msra.mxu0 0.0
    %356 = vmatprep.subr.mxu0 0.0
    %357 = vmatpush1.msra.mxu0 0.0
    %358 = vmatprep.subr.mxu0 0.0
    %359 = vmatpush1.msra.mxu0 0.0
    %360 = vmatprep.subr.mxu0 0.0
    %361 = vmatpush1.msra.mxu0 0.0
    %362 = vmatprep.subr.mxu0 0.0
    %363 = vmatpush1.msra.mxu0 0.0
    %364 = vmatprep.subr.mxu0 0.0
    %365 = vmatpush1.msra.mxu0 0.0
    %366 = vmatprep.subr.mxu0 0.0
    %367 = vmatpush1.msra.mxu0 0.0
    %368 = vmatprep.subr.mxu0 0.0
    %369 = vmatpush1.msra.mxu0 0.0
    %370 = vmatprep.subr.mxu0 0.0
    %371 = vmatpush1.msra.mxu0 0.0
    %372 = vmatprep.subr.mxu0 0.0
    %373 = vmatpush1.msra.mxu0 0.0
    %374 = vmatprep.subr.mxu0 0.0
    %375 = vmatpush1.msra.mxu0 0.0
    %376 = vmatprep.subr.mxu0 0.0
    %377 = vmatpush1.msra.mxu0 0.0
    %378 = vmatprep.subr.mxu0 0.0
    %379 = vmatpush1.msra.mxu0 0.0
    %380 = vmatprep.subr.mxu0 0.0
    %381 = vmatpush1.msra.mxu0 0.0
    %382 = vmatprep.subr.mxu0 0.0
    %383 = vmatpush1.msra.mxu0 0.0
    %384 = vmatprep.subr.mxu0 0.0
    %385 = vmatpush1.msra.mxu0 0.0
    %386 = vmatprep.subr.mxu0 0.0
    %387 = vmatpush1.msra.mxu0 0.0
    %388 = vmatprep.mubr.f32.mxu0 0.0
    %389 = vmatmul.mubr.f32.gmra.mrb[0].mxu0 %v313
    %v390 = vpop.f32.mrb[0].mxu0
    %v391 = vadd.f32 0.0, %v390
    %v392 = vpop.f32.mrb[0].mxu0
    %393 = vmatprep.mubr.f32.mxu0 0.0
    %394 = vmatmul.mubr.f32.gmra.mrb[0].mxu0 %v316
    %v395 = vpop.f32.mrb[0].mxu0
    %v396 = vadd.f32 0.0, %v395
    %v397 = vpop.f32.mrb[0].mxu0
    %398 = vmatprep.mubr.f32.mxu0 0.0
    %399 = vmatmul.mubr.f32.gmra.mrb[0].mxu0 %v319
    %v400 = vpop.f32.mrb[0].mxu0
    %v401 = vadd.f32 0.0, %v400
    %v402 = vpop.f32.mrb[0].mxu0
    %403 = vmatprep.mubr.f32.mxu0 0.0
    %404 = vmatmul.mubr.f32.gmra.mrb[0].mxu0 %v322
    %v405 = vpop.f32.mrb[0].mxu0
    %v406 = vadd.f32 0.0, %v405
    %v407 = vpop.f32.mrb[0].mxu0
    %408 = vdwg.mxu0
    %v409 = vadd.f32 %v280, %v391
    %v410 = vadd.f32 %v285, %v396
    %v411 = vadd.f32 %v290, %v401
    %v412 = vadd.f32 %v295, %v406
    %vm413 = vcmask 523264
    %v414 = vsel %vm413, %v409, 0.0
    %v415 = vsel %vm413, %v410, 0.0
    %v416 = vadd.f32 %v414, %v415
    %v417 = vsel %vm413, %v411, 0.0
    %v418 = vadd.f32 %v416, %v417
    %v419 = vsel %vm413, %v412, 0.0
    %v420 = vadd.f32 %v418, %v419
    %v421 = vrot.slane %v420, 4
    %v422 = vadd.f32 %v420, %v421
    %v423 = vrot.slane %v422, 2
    %v424 = vadd.f32 %v422, %v423
    %v425 = vrot.slane %v424, 1
    %v426 = vadd.f32 %v424, %v425
    %v427 = vmul.f32 %v409, %v409
    %v428 = vmul.f32 %v410, %v410
    %v429 = vmul.f32 %v411, %v411
    %v430 = vmul.f32 %v412, %v412
    %v431 = vsel %vm413, %v427, 0.0
    %v432 = vsel %vm413, %v428, 0.0
    %v433 = vadd.f32 %v431, %v432
    %v434 = vsel %vm413, %v429, 0.0
    %v435 = vadd.f32 %v433, %v434
    %v436 = vsel %vm413, %v430, 0.0
    %v437 = vadd.f32 %v435, %v436
    %v438 = vrot.slane %v437, 4
    %v439 = vadd.f32 %v437, %v438
    %v440 = vrot.slane %v439, 2
    %v441 = vadd.f32 %v439, %v440
    %v442 = vrot.slane %v441, 1
    %v443 = vadd.f32 %v441, %v442
    %v444 = vld [vmem:[%s3] sm:$0xff]
    %v445 = vld [vmem:[%s3 + $0x8] sm:$0xff]
    %v446 = vld [vmem:[%s3 + $0x10] sm:$0xff]
    %v447 = vld [vmem:[%s3 + $0x18] sm:$0xff]
    %v448 = vld [vmem:[%s3 + $0x20] sm:$0xff]
    %v449 = vld [vmem:[%s3 + $0x28] sm:$0xff]
    %v450 = vld [vmem:[%s3 + $0x30] sm:$0xff]
    %v451 = vld [vmem:[%s3 + $0x38] sm:$0xff]
    %v453 = vsel %vm413, %v426, 0
    %455 = vmatprep.subr.mxu0 0.0
    %456 = vmatpush1.msra.mxu0 %v444
    %457 = vmatprep.subr.mxu0 0.0
    %458 = vmatpush1.msra.mxu0 %v445
    %459 = vmatprep.subr.mxu0 0.0
    %460 = vmatpush1.msra.mxu0 %v446
    %461 = vmatprep.subr.mxu0 0.0
    %462 = vmatpush1.msra.mxu0 %v447
    %463 = vmatprep.subr.mxu0 0.0
    %464 = vmatpush1.msra.mxu0 %v448
    %465 = vmatprep.subr.mxu0 0.0
    %466 = vmatpush1.msra.mxu0 %v449
    %467 = vmatprep.subr.mxu0 0.0
    %468 = vmatpush1.msra.mxu0 %v450
    %469 = vmatprep.subr.mxu0 0.0
    %470 = vmatpush1.msra.mxu0 %v451
    %471 = vmatprep.subr.mxu0 0.0
    %472 = vmatpush1.msra.mxu0 0.0
    %473 = vmatprep.subr.mxu0 0.0
    %474 = vmatpush1.msra.mxu0 0.0
    %475 = vmatprep.subr.mxu0 0.0
    %476 = vmatpush1.msra.mxu0 0.0
    %477 = vmatprep.subr.mxu0 0.0
    %478 = vmatpush1.msra.mxu0 0.0
    %479 = vmatprep.subr.mxu0 0.0
    %480 = vmatpush1.msra.mxu0 0.0
    %481 = vmatprep.subr.mxu0 0.0
    %482 = vmatpush1.msra.mxu0 0.0
    %483 = vmatprep.subr.mxu0 0.0
    %484 = vmatpush1.msra.mxu0 0.0
    %485 = vmatprep.subr.mxu0 0.0
    %486 = vmatpush1.msra.mxu0 0.0
    %487 = vmatprep.subr.mxu0 0.0
    %488 = vmatpush1.msra.mxu0 0.0
    %489 = vmatprep.subr.mxu0 0.0
    %490 = vmatpush1.msra.mxu0 0.0
    %491 = vmatprep.subr.mxu0 0.0
    %492 = vmatpush1.msra.mxu0 0.0
    %493 = vmatprep.subr.mxu0 0.0
    %494 = vmatpush1.msra.mxu0 0.0
    %495 = vmatprep.subr.mxu0 0.0
    %496 = vmatpush1.msra.mxu0 0.0
    %497 = vmatprep.subr.mxu0 0.0
    %498 = vmatpush1.msra.mxu0 0.0
    %499 = vmatprep.subr.mxu0 0.0
    %500 = vmatpush1.msra.mxu0 0.0
    %501 = vmatprep.subr.mxu0 0.0
    %502 = vmatpush1.msra.mxu0 0.0
    %503 = vmatprep.subr.mxu0 0.0
    %504 = vmatpush1.msra.mxu0 0.0
    %505 = vmatprep.subr.mxu0 0.0
    %506 = vmatpush1.msra.mxu0 0.0
    %507 = vmatprep.subr.mxu0 0.0
    %508 = vmatpush1.msra.mxu0 0.0
    %509 = vmatprep.subr.mxu0 0.0
    %510 = vmatpush1.msra.mxu0 0.0
    %511 = vmatprep.subr.mxu0 0.0
    %512 = vmatpush1.msra.mxu0 0.0
    %513 = vmatprep.subr.mxu0 0.0
    %514 = vmatpush1.msra.mxu0 0.0
    %515 = vmatprep.subr.mxu0 0.0
    %516 = vmatpush1.msra.mxu0 0.0
    %517 = vmatprep.subr.mxu0 0.0
    %518 = vmatpush1.msra.mxu0 0.0
    %519 = vmatprep.mubr.f32.mxu0 0.0
    %520 = vmatmul.mubr.f32.gmra.mrb[0].mxu0 %v453
    %v521 = vpop.f32.mrb[0].mxu0
    %v522 = vadd.f32 0.0, %v521
    %v523 = vpop.f32.mrb[0].mxu0
    %524 = vdwg.mxu0
    %v525 = vmul.f32 %v522, 0.001953125
    %v527 = vsel %vm413, %v443, 0
    %529 = vmatprep.subr.mxu0 0.0
    %530 = vmatpush1.msra.mxu0 %v444
    %531 = vmatprep.subr.mxu0 0.0
    %532 = vmatpush1.msra.mxu0 %v445
    %533 = vmatprep.subr.mxu0 0.0
    %534 = vmatpush1.msra.mxu0 %v446
    %535 = vmatprep.subr.mxu0 0.0
    %536 = vmatpush1.msra.mxu0 %v447
    %537 = vmatprep.subr.mxu0 0.0
    %538 = vmatpush1.msra.mxu0 %v448
    %539 = vmatprep.subr.mxu0 0.0
    %540 = vmatpush1.msra.mxu0 %v449
    %541 = vmatprep.subr.mxu0 0.0
    %542 = vmatpush1.msra.mxu0 %v450
    %543 = vmatprep.subr.mxu0 0.0
    %544 = vmatpush1.msra.mxu0 %v451
    %545 = vmatprep.subr.mxu0 0.0
    %546 = vmatpush1.msra.mxu0 0.0
    %547 = vmatprep.subr.mxu0 0.0
    %548 = vmatpush1.msra.mxu0 0.0
    %549 = vmatprep.subr.mxu0 0.0
    %550 = vmatpush1.msra.mxu0 0.0
    %551 = vmatprep.subr.mxu0 0.0
    %552 = vmatpush1.msra.mxu0 0.0
    %553 = vmatprep.subr.mxu0 0.0
    %554 = vmatpush1.msra.mxu0 0.0
    %555 = vmatprep.subr.mxu0 0.0
    %556 = vmatpush1.msra.mxu0 0.0
    %557 = vmatprep.subr.mxu0 0.0
    %558 = vmatpush1.msra.mxu0 0.0
    %559 = vmatprep.subr.mxu0 0.0
    %560 = vmatpush1.msra.mxu0 0.0
    %561 = vmatprep.subr.mxu0 0.0
    %562 = vmatpush1.msra.mxu0 0.0
    %563 = vmatprep.subr.mxu0 0.0
    %564 = vmatpush1.msra.mxu0 0.0
    %565 = vmatprep.subr.mxu0 0.0
    %566 = vmatpush1.msra.mxu0 0.0
    %567 = vmatprep.subr.mxu0 0.0
    %568 = vmatpush1.msra.mxu0 0.0
    %569 = vmatprep.subr.mxu0 0.0
    %570 = vmatpush1.msra.mxu0 0.0
    %571 = vmatprep.subr.mxu0 0.0
    %572 = vmatpush1.msra.mxu0 0.0
    %573 = vmatprep.subr.mxu0 0.0
    %574 = vmatpush1.msra.mxu0 0.0
    %575 = vmatprep.subr.mxu0 0.0
    %576 = vmatpush1.msra.mxu0 0.0
    %577 = vmatprep.subr.mxu0 0.0
    %578 = vmatpush1.msra.mxu0 0.0
    %579 = vmatprep.subr.mxu0 0.0
    %580 = vmatpush1.msra.mxu0 0.0
    %581 = vmatprep.subr.mxu0 0.0
    %582 = vmatpush1.msra.mxu0 0.0
    %583 = vmatprep.subr.mxu0 0.0
    %584 = vmatpush1.msra.mxu0 0.0
    %585 = vmatprep.subr.mxu0 0.0
    %586 = vmatpush1.msra.mxu0 0.0
    %587 = vmatprep.subr.mxu0 0.0
    %588 = vmatpush1.msra.mxu0 0.0
    %589 = vmatprep.subr.mxu0 0.0
    %590 = vmatpush1.msra.mxu0 0.0
    %591 = vmatprep.subr.mxu0 0.0
    %592 = vmatpush1.msra.mxu0 0.0
    %593 = vmatprep.mubr.f32.mxu0 0.0
    %594 = vmatmul.mubr.f32.gmra.mrb[0].mxu0 %v527
    %v595 = vpop.f32.mrb[0].mxu0
    %v596 = vadd.f32 0.0, %v595
    %v597 = vpop.f32.mrb[0].mxu0
    %598 = vdwg.mxu0
    %v599 = vmul.f32 %v596, 0.001953125
    %v600 = vmul.f32 %v525, %v525
    %v601 = vsub.f32 %v599, %v600
    %v602 = vld [vmem:[%s4] sm:$0x1]
    %v603 = vadd.f32 %v601, 1e-05
    %v604 = vrsqrt.pop %v603
    %v605 = vmul.f32 %v602, %v604
    %v606 = vld [vmem:[%s5] sm:$0x1]
    %v607 = vmul.f32 %v525, %v605
    %v608 = vsub.f32 %v606, %v607
    %v610 = vlaneseq
    %v611 = vshrl.u32 %v610, 7
    %v612 = vsub.s32 0, %v611
    %v613 = vrot.slane %v605, %v612
    %v615 = vmul.f32 %v409, %v613
    %v616 = vmul.f32 %v410, %v613
    %v617 = vmul.f32 %v411, %v613
    %v618 = vmul.f32 %v412, %v613
    %v620 = vlaneseq
    %v621 = vshrl.u32 %v620, 7
    %v622 = vsub.s32 0, %v621
    %v623 = vrot.slane %v608, %v622
    %v625 = vadd.f32 %v615, %v623
    %v626 = vadd.f32 %v616, %v623
    %v627 = vadd.f32 %v617, %v623
    %v628 = vadd.f32 %v618, %v623
    %v629 = vmax.f32 %v625, 0.0
    %v630 = vmax.f32 %v626, 0.0
    %v631 = vmax.f32 %v627, 0.0
    %v632 = vmax.f32 %v628, 0.0
    %637 = vrot.lane.b32.xlu0 %v629, 4
    %v638 = vpop.permute.xlu0 %637
    %639 = vrot.lane.b32.xlu0 %v630, 4
    %v640 = vpop.permute.xlu0 %639
    %641 = vrot.lane.b32.xlu0 %v631, 4
    %v642 = vpop.permute.xlu0 %641
    %643 = vrot.lane.b32.xlu0 %v632, 4
    %v644 = vpop.permute.xlu0 %643
    %649 = vst.msk [vmem:[#allocation2 + $0x1] sm:$0xff] %vm71, %v638
    %650 = vst.msk [vmem:[#allocation2 + $0x9] sm:$0xff] %vm71, %v640
    %651 = vst.msk [vmem:[#allocation2 + $0x19] sm:$0xff] %vm71, %v642
    %652 = vst.msk [vmem:[#allocation2 + $0x21] sm:$0xff] %vm71, %v644
    %v653 = vld [vmem:[#allocation2] sm:$0xff]
    %v654 = vld [vmem:[#allocation2 + $0x8] sm:$0xff]
    %v655 = vld [vmem:[#allocation2 + $0x18] sm:$0xff]
    %v656 = vld [vmem:[#allocation2 + $0x20] sm:$0xff]
    %v657 = vld [vmem:[%s2] sm:$0xff]
    %v658 = vld [vmem:[%s2 + $0x8] sm:$0xff]
    %v659 = vld [vmem:[%s2 + $0x10] sm:$0xff]
    %v660 = vld [vmem:[%s2 + $0x18] sm:$0xff]
    %v661 = vld [vmem:[%s2 + $0x20] sm:$0xff]
    %v662 = vld [vmem:[%s2 + $0x28] sm:$0xff]
    %v663 = vld [vmem:[%s2 + $0x30] sm:$0xff]
    %v664 = vld [vmem:[%s2 + $0x38] sm:$0xff]
    %v665 = vld [vmem:[%s2 + $0x40] sm:$0xff]
    %v666 = vld [vmem:[#allocation2 + $0x1] sm:$0xff]
    %v667 = vld [vmem:[#allocation2 + $0x9] sm:$0xff]
    %v668 = vld [vmem:[#allocation2 + $0x19] sm:$0xff]
    %v669 = vld [vmem:[#allocation2 + $0x21] sm:$0xff]
    %s670 = scalar_lea.vmem %s2, 72
    %v671 = vld [vmem:[%s670] sm:$0xff]
    %v672 = vld [vmem:[%s670 + $0x8] sm:$0xff]
    %v673 = vld [vmem:[%s670 + $0x10] sm:$0xff]
    %v674 = vld [vmem:[%s670 + $0x18] sm:$0xff]
    %v675 = vld [vmem:[%s670 + $0x20] sm:$0xff]
    %v676 = vld [vmem:[%s670 + $0x28] sm:$0xff]
    %v677 = vld [vmem:[%s670 + $0x30] sm:$0xff]
    %v678 = vld [vmem:[%s670 + $0x38] sm:$0xff]
    %v679 = vld [vmem:[%s670 + $0x40] sm:$0xff]
    %v681 = vsel %vm103, %v666, 0
    %v684 = vsel %vm103, %v667, 0
    %v687 = vsel %vm103, %v668, 0
    %v690 = vsel %vm103, %v669, 0
    %692 = vmatprep.subr.mxu0 0.0
    %693 = vmatpush1.msra.mxu0 %v671
    %694 = vmatprep.subr.mxu0 0.0
    %695 = vmatpush1.msra.mxu0 %v672
    %696 = vmatprep.subr.mxu0 0.0
    %697 = vmatpush1.msra.mxu0 %v673
    %698 = vmatprep.subr.mxu0 0.0
    %699 = vmatpush1.msra.mxu0 %v674
    %700 = vmatprep.subr.mxu0 0.0
    %701 = vmatpush1.msra.mxu0 %v675
    %702 = vmatprep.subr.mxu0 0.0
    %703 = vmatpush1.msra.mxu0 %v676
    %704 = vmatprep.subr.mxu0 0.0
    %705 = vmatpush1.msra.mxu0 %v677
    %706 = vmatprep.subr.mxu0 0.0
    %707 = vmatpush1.msra.mxu0 %v678
    %708 = vmatprep.subr.mxu0 0.0
    %709 = vmatpush1.msra.mxu0 %v679
    %710 = vmatprep.subr.mxu0 0.0
    %711 = vmatpush1.msra.mxu0 0.0
    %712 = vmatprep.subr.mxu0 0.0
    %713 = vmatpush1.msra.mxu0 0.0
    %714 = vmatprep.subr.mxu0 0.0
    %715 = vmatpush1.msra.mxu0 0.0
    %716 = vmatprep.subr.mxu0 0.0
    %717 = vmatpush1.msra.mxu0 0.0
    %718 = vmatprep.subr.mxu0 0.0
    %719 = vmatpush1.msra.mxu0 0.0
    %720 = vmatprep.subr.mxu0 0.0
    %721 = vmatpush1.msra.mxu0 0.0
    %722 = vmatprep.subr.mxu0 0.0
    %723 = vmatpush1.msra.mxu0 0.0
    %724 = vmatprep.subr.mxu0 0.0
    %725 = vmatpush1.msra.mxu0 0.0
    %726 = vmatprep.subr.mxu0 0.0
    %727 = vmatpush1.msra.mxu0 0.0
    %728 = vmatprep.subr.mxu0 0.0
    %729 = vmatpush1.msra.mxu0 0.0
    %730 = vmatprep.subr.mxu0 0.0
    %731 = vmatpush1.msra.mxu0 0.0
    %732 = vmatprep.subr.mxu0 0.0
    %733 = vmatpush1.msra.mxu0 0.0
    %734 = vmatprep.subr.mxu0 0.0
    %735 = vmatpush1.msra.mxu0 0.0
    %736 = vmatprep.subr.mxu0 0.0
    %737 = vmatpush1.msra.mxu0 0.0
    %738 = vmatprep.subr.mxu0 0.0
    %739 = vmatpush1.msra.mxu0 0.0
    %740 = vmatprep.subr.mxu0 0.0
    %741 = vmatpush1.msra.mxu0 0.0
    %742 = vmatprep.subr.mxu0 0.0
    %743 = vmatpush1.msra.mxu0 0.0
    %744 = vmatprep.subr.mxu0 0.0
    %745 = vmatpush1.msra.mxu0 0.0
    %746 = vmatprep.subr.mxu0 0.0
    %747 = vmatpush1.msra.mxu0 0.0
    %748 = vmatprep.subr.mxu0 0.0
    %749 = vmatpush1.msra.mxu0 0.0
    %750 = vmatprep.subr.mxu0 0.0
    %751 = vmatpush1.msra.mxu0 0.0
    %752 = vmatprep.subr.mxu0 0.0
    %753 = vmatpush1.msra.mxu0 0.0
    %754 = vmatprep.subr.mxu0 0.0
    %755 = vmatpush1.msra.mxu0 0.0
    %756 = vmatprep.mubr.f32.mxu0 0.0
    %757 = vmatmul.mubr.f32.gmra.mrb[0].mxu0 %v681
    %v758 = vpop.f32.mrb[0].mxu0
    %v759 = vadd.f32 0.0, %v758
    %v760 = vpop.f32.mrb[0].mxu0
    %761 = vmatprep.mubr.f32.mxu0 0.0
    %762 = vmatmul.mubr.f32.gmra.mrb[0].mxu0 %v684
    %v763 = vpop.f32.mrb[0].mxu0
    %v764 = vadd.f32 0.0, %v763
    %v765 = vpop.f32.mrb[0].mxu0
    %766 = vmatprep.mubr.f32.mxu0 0.0
    %767 = vmatmul.mubr.f32.gmra.mrb[0].mxu0 %v687
    %v768 = vpop.f32.mrb[0].mxu0
    %v769 = vadd.f32 0.0, %v768
    %v770 = vpop.f32.mrb[0].mxu0
    %771 = vmatprep.mubr.f32.mxu0 0.0
    %772 = vmatmul.mubr.f32.gmra.mrb[0].mxu0 %v690
    %v773 = vpop.f32.mrb[0].mxu0
    %v774 = vadd.f32 0.0, %v773
    %v775 = vpop.f32.mrb[0].mxu0
    %776 = vdwg.mxu0
    %v778 = vsel %vm103, %v653, 0
    %v781 = vsel %vm103, %v654, 0
    %v784 = vsel %vm103, %v655, 0
    %v787 = vsel %vm103, %v656, 0
    %789 = vmatprep.subr.mxu0 0.0
    %790 = vmatpush1.msra.mxu0 %v657
    %791 = vmatprep.subr.mxu0 0.0
    %792 = vmatpush1.msra.mxu0 %v658
    %793 = vmatprep.subr.mxu0 0.0
    %794 = vmatpush1.msra.mxu0 %v659
    %795 = vmatprep.subr.mxu0 0.0
    %796 = vmatpush1.msra.mxu0 %v660
    %797 = vmatprep.subr.mxu0 0.0
    %798 = vmatpush1.msra.mxu0 %v661
    %799 = vmatprep.subr.mxu0 0.0
    %800 = vmatpush1.msra.mxu0 %v662
    %801 = vmatprep.subr.mxu0 0.0
    %802 = vmatpush1.msra.mxu0 %v663
    %803 = vmatprep.subr.mxu0 0.0
    %804 = vmatpush1.msra.mxu0 %v664
    %805 = vmatprep.subr.mxu0 0.0
    %806 = vmatpush1.msra.mxu0 %v665
    %807 = vmatprep.subr.mxu0 0.0
    %808 = vmatpush1.msra.mxu0 0.0
    %809 = vmatprep.subr.mxu0 0.0
    %810 = vmatpush1.msra.mxu0 0.0
    %811 = vmatprep.subr.mxu0 0.0
    %812 = vmatpush1.msra.mxu0 0.0
    %813 = vmatprep.subr.mxu0 0.0
    %814 = vmatpush1.msra.mxu0 0.0
    %815 = vmatprep.subr.mxu0 0.0
    %816 = vmatpush1.msra.mxu0 0.0
    %817 = vmatprep.subr.mxu0 0.0
    %818 = vmatpush1.msra.mxu0 0.0
    %819 = vmatprep.subr.mxu0 0.0
    %820 = vmatpush1.msra.mxu0 0.0
    %821 = vmatprep.subr.mxu0 0.0
    %822 = vmatpush1.msra.mxu0 0.0
    %823 = vmatprep.subr.mxu0 0.0
    %824 = vmatpush1.msra.mxu0 0.0
    %825 = vmatprep.subr.mxu0 0.0
    %826 = vmatpush1.msra.mxu0 0.0
    %827 = vmatprep.subr.mxu0 0.0
    %828 = vmatpush1.msra.mxu0 0.0
    %829 = vmatprep.subr.mxu0 0.0
    %830 = vmatpush1.msra.mxu0 0.0
    %831 = vmatprep.subr.mxu0 0.0
    %832 = vmatpush1.msra.mxu0 0.0
    %833 = vmatprep.subr.mxu0 0.0
    %834 = vmatpush1.msra.mxu0 0.0
    %835 = vmatprep.subr.mxu0 0.0
    %836 = vmatpush1.msra.mxu0 0.0
    %837 = vmatprep.subr.mxu0 0.0
    %838 = vmatpush1.msra.mxu0 0.0
    %839 = vmatprep.subr.mxu0 0.0
    %840 = vmatpush1.msra.mxu0 0.0
    %841 = vmatprep.subr.mxu0 0.0
    %842 = vmatpush1.msra.mxu0 0.0
    %843 = vmatprep.subr.mxu0 0.0
    %844 = vmatpush1.msra.mxu0 0.0
    %845 = vmatprep.subr.mxu0 0.0
    %846 = vmatpush1.msra.mxu0 0.0
    %847 = vmatprep.subr.mxu0 0.0
    %848 = vmatpush1.msra.mxu0 0.0
    %849 = vmatprep.subr.mxu0 0.0
    %850 = vmatpush1.msra.mxu0 0.0
    %851 = vmatprep.subr.mxu0 0.0
    %852 = vmatpush1.msra.mxu0 0.0
    %853 = vmatprep.mubr.f32.mxu0 0.0
    %854 = vmatmul.mubr.f32.gmra.mrb[0].mxu0 %v778
    %v855 = vpop.f32.mrb[0].mxu0
    %v856 = vadd.f32 %v759, %v855
    %v857 = vpop.f32.mrb[0].mxu0
    %858 = vmatprep.mubr.f32.mxu0 0.0
    %859 = vmatmul.mubr.f32.gmra.mrb[0].mxu0 %v781
    %v860 = vpop.f32.mrb[0].mxu0
    %v861 = vadd.f32 %v764, %v860
    %v862 = vpop.f32.mrb[0].mxu0
    %863 = vmatprep.mubr.f32.mxu0 0.0
    %864 = vmatmul.mubr.f32.gmra.mrb[0].mxu0 %v784
    %v865 = vpop.f32.mrb[0].mxu0
    %v866 = vadd.f32 %v769, %v865
    %v867 = vpop.f32.mrb[0].mxu0
    %868 = vmatprep.mubr.f32.mxu0 0.0
    %869 = vmatmul.mubr.f32.gmra.mrb[0].mxu0 %v787
    %v870 = vpop.f32.mrb[0].mxu0
    %v871 = vadd.f32 %v774, %v870
    %v872 = vpop.f32.mrb[0].mxu0
    %873 = vdwg.mxu0
    %v874 = vld [vmem:[#allocation2 + $0x2] sm:$0xff]
    %v875 = vld [vmem:[#allocation2 + $0xa] sm:$0xff]
    %v876 = vld [vmem:[#allocation2 + $0x1a] sm:$0xff]
    %v877 = vld [vmem:[#allocation2 + $0x22] sm:$0xff]
    %s878 = scalar_lea.vmem %s2, 144
    %v879 = vld [vmem:[%s878] sm:$0xff]
    %v880 = vld [vmem:[%s878 + $0x8] sm:$0xff]
    %v881 = vld [vmem:[%s878 + $0x10] sm:$0xff]
    %v882 = vld [vmem:[%s878 + $0x18] sm:$0xff]
    %v883 = vld [vmem:[%s878 + $0x20] sm:$0xff]
    %v884 = vld [vmem:[%s878 + $0x28] sm:$0xff]
    %v885 = vld [vmem:[%s878 + $0x30] sm:$0xff]
    %v886 = vld [vmem:[%s878 + $0x38] sm:$0xff]
    %v887 = vld [vmem:[%s878 + $0x40] sm:$0xff]
    %v889 = vsel %vm103, %v874, 0
    %v892 = vsel %vm103, %v875, 0
    %v895 = vsel %vm103, %v876, 0
    %v898 = vsel %vm103, %v877, 0
    %900 = vmatprep.subr.mxu0 0.0
    %901 = vmatpush1.msra.mxu0 %v879
    %902 = vmatprep.subr.mxu0 0.0
    %903 = vmatpush1.msra.mxu0 %v880
    %904 = vmatprep.subr.mxu0 0.0
    %905 = vmatpush1.msra.mxu0 %v881
    %906 = vmatprep.subr.mxu0 0.0
    %907 = vmatpush1.msra.mxu0 %v882
    %908 = vmatprep.subr.mxu0 0.0
    %909 = vmatpush1.msra.mxu0 %v883
    %910 = vmatprep.subr.mxu0 0.0
    %911 = vmatpush1.msra.mxu0 %v884
    %912 = vmatprep.subr.mxu0 0.0
    %913 = vmatpush1.msra.mxu0 %v885
    %914 = vmatprep.subr.mxu0 0.0
    %915 = vmatpush1.msra.mxu0 %v886
    %916 = vmatprep.subr.mxu0 0.0
    %917 = vmatpush1.msra.mxu0 %v887
    %918 = vmatprep.subr.mxu0 0.0
    %919 = vmatpush1.msra.mxu0 0.0
    %920 = vmatprep.subr.mxu0 0.0
    %921 = vmatpush1.msra.mxu0 0.0
    %922 = vmatprep.subr.mxu0 0.0
    %923 = vmatpush1.msra.mxu0 0.0
    %924 = vmatprep.subr.mxu0 0.0
    %925 = vmatpush1.msra.mxu0 0.0
    %926 = vmatprep.subr.mxu0 0.0
    %927 = vmatpush1.msra.mxu0 0.0
    %928 = vmatprep.subr.mxu0 0.0
    %929 = vmatpush1.msra.mxu0 0.0
    %930 = vmatprep.subr.mxu0 0.0
    %931 = vmatpush1.msra.mxu0 0.0
    %932 = vmatprep.subr.mxu0 0.0
    %933 = vmatpush1.msra.mxu0 0.0
    %934 = vmatprep.subr.mxu0 0.0
    %935 = vmatpush1.msra.mxu0 0.0
    %936 = vmatprep.subr.mxu0 0.0
    %937 = vmatpush1.msra.mxu0 0.0
    %938 = vmatprep.subr.mxu0 0.0
    %939 = vmatpush1.msra.mxu0 0.0
    %940 = vmatprep.subr.mxu0 0.0
    %941 = vmatpush1.msra.mxu0 0.0
    %942 = vmatprep.subr.mxu0 0.0
    %943 = vmatpush1.msra.mxu0 0.0
    %944 = vmatprep.subr.mxu0 0.0
    %945 = vmatpush1.msra.mxu0 0.0
    %946 = vmatprep.subr.mxu0 0.0
    %947 = vmatpush1.msra.mxu0 0.0
    %948 = vmatprep.subr.mxu0 0.0
    %949 = vmatpush1.msra.mxu0 0.0
    %950 = vmatprep.subr.mxu0 0.0
    %951 = vmatpush1.msra.mxu0 0.0
    %952 = vmatprep.subr.mxu0 0.0
    %953 = vmatpush1.msra.mxu0 0.0
    %954 = vmatprep.subr.mxu0 0.0
    %955 = vmatpush1.msra.mxu0 0.0
    %956 = vmatprep.subr.mxu0 0.0
    %957 = vmatpush1.msra.mxu0 0.0
    %958 = vmatprep.subr.mxu0 0.0
    %959 = vmatpush1.msra.mxu0 0.0
    %960 = vmatprep.subr.mxu0 0.0
    %961 = vmatpush1.msra.mxu0 0.0
    %962 = vmatprep.subr.mxu0 0.0
    %963 = vmatpush1.msra.mxu0 0.0
    %964 = vmatprep.mubr.f32.mxu0 0.0
    %965 = vmatmul.mubr.f32.gmra.mrb[0].mxu0 %v889
    %v966 = vpop.f32.mrb[0].mxu0
    %v967 = vadd.f32 0.0, %v966
    %v968 = vpop.f32.mrb[0].mxu0
    %969 = vmatprep.mubr.f32.mxu0 0.0
    %970 = vmatmul.mubr.f32.gmra.mrb[0].mxu0 %v892
    %v971 = vpop.f32.mrb[0].mxu0
    %v972 = vadd.f32 0.0, %v971
    %v973 = vpop.f32.mrb[0].mxu0
    %974 = vmatprep.mubr.f32.mxu0 0.0
    %975 = vmatmul.mubr.f32.gmra.mrb[0].mxu0 %v895
    %v976 = vpop.f32.mrb[0].mxu0
    %v977 = vadd.f32 0.0, %v976
    %v978 = vpop.f32.mrb[0].mxu0
    %979 = vmatprep.mubr.f32.mxu0 0.0
    %980 = vmatmul.mubr.f32.gmra.mrb[0].mxu0 %v898
    %v981 = vpop.f32.mrb[0].mxu0
    %v982 = vadd.f32 0.0, %v981
    %v983 = vpop.f32.mrb[0].mxu0
    %984 = vdwg.mxu0
    %v985 = vadd.f32 %v856, %v967
    %v986 = vadd.f32 %v861, %v972
    %v987 = vadd.f32 %v866, %v977
    %v988 = vadd.f32 %v871, %v982
    %v989 = vsel %vm413, %v985, 0.0
    %v990 = vsel %vm413, %v986, 0.0
    %v991 = vadd.f32 %v989, %v990
    %v992 = vsel %vm413, %v987, 0.0
    %v993 = vadd.f32 %v991, %v992
    %v994 = vsel %vm413, %v988, 0.0
    %v995 = vadd.f32 %v993, %v994
    %v996 = vrot.slane %v995, 4
    %v997 = vadd.f32 %v995, %v996
    %v998 = vrot.slane %v997, 2
    %v999 = vadd.f32 %v997, %v998
    %v1000 = vrot.slane %v999, 1
    %v1001 = vadd.f32 %v999, %v1000
    %v1002 = vmul.f32 %v985, %v985
    %v1003 = vmul.f32 %v986, %v986
    %v1004 = vmul.f32 %v987, %v987
    %v1005 = vmul.f32 %v988, %v988
    %v1006 = vsel %vm413, %v1002, 0.0
    %v1007 = vsel %vm413, %v1003, 0.0
    %v1008 = vadd.f32 %v1006, %v1007
    %v1009 = vsel %vm413, %v1004, 0.0
    %v1010 = vadd.f32 %v1008, %v1009
    %v1011 = vsel %vm413, %v1005, 0.0
    %v1012 = vadd.f32 %v1010, %v1011
    %v1013 = vrot.slane %v1012, 4
    %v1014 = vadd.f32 %v1012, %v1013
    %v1015 = vrot.slane %v1014, 2
    %v1016 = vadd.f32 %v1014, %v1015
    %v1017 = vrot.slane %v1016, 1
    %v1018 = vadd.f32 %v1016, %v1017
    %v1019 = vld [vmem:[%s3] sm:$0xff]
    %v1020 = vld [vmem:[%s3 + $0x8] sm:$0xff]
    %v1021 = vld [vmem:[%s3 + $0x10] sm:$0xff]
    %v1022 = vld [vmem:[%s3 + $0x18] sm:$0xff]
    %v1023 = vld [vmem:[%s3 + $0x20] sm:$0xff]
    %v1024 = vld [vmem:[%s3 + $0x28] sm:$0xff]
    %v1025 = vld [vmem:[%s3 + $0x30] sm:$0xff]
    %v1026 = vld [vmem:[%s3 + $0x38] sm:$0xff]
    %v1028 = vsel %vm413, %v1001, 0
    %1030 = vmatprep.subr.mxu0 0.0
    %1031 = vmatpush1.msra.mxu0 %v1019
    %1032 = vmatprep.subr.mxu0 0.0
    %1033 = vmatpush1.msra.mxu0 %v1020
    %1034 = vmatprep.subr.mxu0 0.0
    %1035 = vmatpush1.msra.mxu0 %v1021
    %1036 = vmatprep.subr.mxu0 0.0
    %1037 = vmatpush1.msra.mxu0 %v1022
    %1038 = vmatprep.subr.mxu0 0.0
    %1039 = vmatpush1.msra.mxu0 %v1023
    %1040 = vmatprep.subr.mxu0 0.0
    %1041 = vmatpush1.msra.mxu0 %v1024
    %1042 = vmatprep.subr.mxu0 0.0
    %1043 = vmatpush1.msra.mxu0 %v1025
    %1044 = vmatprep.subr.mxu0 0.0
    %1045 = vmatpush1.msra.mxu0 %v1026
    %1046 = vmatprep.subr.mxu0 0.0
    %1047 = vmatpush1.msra.mxu0 0.0
    %1048 = vmatprep.subr.mxu0 0.0
    %1049 = vmatpush1.msra.mxu0 0.0
    %1050 = vmatprep.subr.mxu0 0.0
    %1051 = vmatpush1.msra.mxu0 0.0
    %1052 = vmatprep.subr.mxu0 0.0
    %1053 = vmatpush1.msra.mxu0 0.0
    %1054 = vmatprep.subr.mxu0 0.0
    %1055 = vmatpush1.msra.mxu0 0.0
    %1056 = vmatprep.subr.mxu0 0.0
    %1057 = vmatpush1.msra.mxu0 0.0
    %1058 = vmatprep.subr.mxu0 0.0
    %1059 = vmatpush1.msra.mxu0 0.0
    %1060 = vmatprep.subr.mxu0 0.0
    %1061 = vmatpush1.msra.mxu0 0.0
    %1062 = vmatprep.subr.mxu0 0.0
    %1063 = vmatpush1.msra.mxu0 0.0
    %1064 = vmatprep.subr.mxu0 0.0
    %1065 = vmatpush1.msra.mxu0 0.0
    %1066 = vmatprep.subr.mxu0 0.0
    %1067 = vmatpush1.msra.mxu0 0.0
    %1068 = vmatprep.subr.mxu0 0.0
    %1069 = vmatpush1.msra.mxu0 0.0
    %1070 = vmatprep.subr.mxu0 0.0
    %1071 = vmatpush1.msra.mxu0 0.0
    %1072 = vmatprep.subr.mxu0 0.0
    %1073 = vmatpush1.msra.mxu0 0.0
    %1074 = vmatprep.subr.mxu0 0.0
    %1075 = vmatpush1.msra.mxu0 0.0
    %1076 = vmatprep.subr.mxu0 0.0
    %1077 = vmatpush1.msra.mxu0 0.0
    %1078 = vmatprep.subr.mxu0 0.0
    %1079 = vmatpush1.msra.mxu0 0.0
    %1080 = vmatprep.subr.mxu0 0.0
    %1081 = vmatpush1.msra.mxu0 0.0
    %1082 = vmatprep.subr.mxu0 0.0
    %1083 = vmatpush1.msra.mxu0 0.0
    %1084 = vmatprep.subr.mxu0 0.0
    %1085 = vmatpush1.msra.mxu0 0.0
    %1086 = vmatprep.subr.mxu0 0.0
    %1087 = vmatpush1.msra.mxu0 0.0
    %1088 = vmatprep.subr.mxu0 0.0
    %1089 = vmatpush1.msra.mxu0 0.0
    %1090 = vmatprep.subr.mxu0 0.0
    %1091 = vmatpush1.msra.mxu0 0.0
    %1092 = vmatprep.subr.mxu0 0.0
    %1093 = vmatpush1.msra.mxu0 0.0
    %1094 = vmatprep.mubr.f32.mxu0 0.0
    %1095 = vmatmul.mubr.f32.gmra.mrb[0].mxu0 %v1028
    %v1096 = vpop.f32.mrb[0].mxu0
    %v1097 = vadd.f32 0.0, %v1096
    %v1098 = vpop.f32.mrb[0].mxu0
    %1099 = vdwg.mxu0
    %v1100 = vmul.f32 %v1097, 0.001953125
    %v1102 = vsel %vm413, %v1018, 0
    %1104 = vmatprep.subr.mxu0 0.0
    %1105 = vmatpush1.msra.mxu0 %v1019
    %1106 = vmatprep.subr.mxu0 0.0
    %1107 = vmatpush1.msra.mxu0 %v1020
    %1108 = vmatprep.subr.mxu0 0.0
    %1109 = vmatpush1.msra.mxu0 %v1021
    %1110 = vmatprep.subr.mxu0 0.0
    %1111 = vmatpush1.msra.mxu0 %v1022
    %1112 = vmatprep.subr.mxu0 0.0
    %1113 = vmatpush1.msra.mxu0 %v1023
    %1114 = vmatprep.subr.mxu0 0.0
    %1115 = vmatpush1.msra.mxu0 %v1024
    %1116 = vmatprep.subr.mxu0 0.0
    %1117 = vmatpush1.msra.mxu0 %v1025
    %1118 = vmatprep.subr.mxu0 0.0
    %1119 = vmatpush1.msra.mxu0 %v1026
    %1120 = vmatprep.subr.mxu0 0.0
    %1121 = vmatpush1.msra.mxu0 0.0
    %1122 = vmatprep.subr.mxu0 0.0
    %1123 = vmatpush1.msra.mxu0 0.0
    %1124 = vmatprep.subr.mxu0 0.0
    %1125 = vmatpush1.msra.mxu0 0.0
    %1126 = vmatprep.subr.mxu0 0.0
    %1127 = vmatpush1.msra.mxu0 0.0
    %1128 = vmatprep.subr.mxu0 0.0
    %1129 = vmatpush1.msra.mxu0 0.0
    %1130 = vmatprep.subr.mxu0 0.0
    %1131 = vmatpush1.msra.mxu0 0.0
    %1132 = vmatprep.subr.mxu0 0.0
    %1133 = vmatpush1.msra.mxu0 0.0
    %1134 = vmatprep.subr.mxu0 0.0
    %1135 = vmatpush1.msra.mxu0 0.0
    %1136 = vmatprep.subr.mxu0 0.0
    %1137 = vmatpush1.msra.mxu0 0.0
    %1138 = vmatprep.subr.mxu0 0.0
    %1139 = vmatpush1.msra.mxu0 0.0
    %1140 = vmatprep.subr.mxu0 0.0
    %1141 = vmatpush1.msra.mxu0 0.0
    %1142 = vmatprep.subr.mxu0 0.0
    %1143 = vmatpush1.msra.mxu0 0.0
    %1144 = vmatprep.subr.mxu0 0.0
    %1145 = vmatpush1.msra.mxu0 0.0
    %1146 = vmatprep.subr.mxu0 0.0
    %1147 = vmatpush1.msra.mxu0 0.0
    %1148 = vmatprep.subr.mxu0 0.0
    %1149 = vmatpush1.msra.mxu0 0.0
    %1150 = vmatprep.subr.mxu0 0.0
    %1151 = vmatpush1.msra.mxu0 0.0
    %1152 = vmatprep.subr.mxu0 0.0
    %1153 = vmatpush1.msra.mxu0 0.0
    %1154 = vmatprep.subr.mxu0 0.0
    %1155 = vmatpush1.msra.mxu0 0.0
    %1156 = vmatprep.subr.mxu0 0.0
    %1157 = vmatpush1.msra.mxu0 0.0
    %1158 = vmatprep.subr.mxu0 0.0
    %1159 = vmatpush1.msra.mxu0 0.0
    %1160 = vmatprep.subr.mxu0 0.0
    %1161 = vmatpush1.msra.mxu0 0.0
    %1162 = vmatprep.subr.mxu0 0.0
    %1163 = vmatpush1.msra.mxu0 0.0
    %1164 = vmatprep.subr.mxu0 0.0
    %1165 = vmatpush1.msra.mxu0 0.0
    %1166 = vmatprep.subr.mxu0 0.0
    %1167 = vmatpush1.msra.mxu0 0.0
    %1168 = vmatprep.mubr.f32.mxu0 0.0
    %1169 = vmatmul.mubr.f32.gmra.mrb[0].mxu0 %v1102
    %v1170 = vpop.f32.mrb[0].mxu0
    %v1171 = vadd.f32 0.0, %v1170
    %v1172 = vpop.f32.mrb[0].mxu0
    %1173 = vdwg.mxu0
    %v1174 = vmul.f32 %v1171, 0.001953125
    %v1175 = vmul.f32 %v1100, %v1100
    %v1176 = vsub.f32 %v1174, %v1175
    %v1177 = vld [vmem:[%s6] sm:$0x1]
    %v1178 = vadd.f32 %v1176, 1e-05
    %v1179 = vrsqrt.pop %v1178
    %v1180 = vmul.f32 %v1177, %v1179
    %v1181 = vld [vmem:[%s7] sm:$0x1]
    %v1182 = vmul.f32 %v1100, %v1180
    %v1183 = vsub.f32 %v1181, %v1182
    %v1185 = vlaneseq
    %v1186 = vshrl.u32 %v1185, 7
    %v1187 = vsub.s32 0, %v1186
    %v1188 = vrot.slane %v1180, %v1187
    %v1190 = vmul.f32 %v985, %v1188
    %v1191 = vmul.f32 %v986, %v1188
    %v1192 = vmul.f32 %v987, %v1188
    %v1193 = vmul.f32 %v988, %v1188
    %v1195 = vlaneseq
    %v1196 = vshrl.u32 %v1195, 7
    %v1197 = vsub.s32 0, %v1196
    %v1198 = vrot.slane %v1183, %v1197
    %v1200 = vadd.f32 %v1190, %v1198
    %v1201 = vadd.f32 %v1191, %v1198
    %v1202 = vadd.f32 %v1192, %v1198
    %v1203 = vadd.f32 %v1193, %v1198
    %v1204 = vld [vmem:[%s0] sm:$0xff]
    %v1205 = vld [vmem:[%s0 + $0x8] sm:$0xff]
    %v1206 = vld [vmem:[%s0 + $0x10] sm:$0xff]
    %v1207 = vld [vmem:[%s0 + $0x18] sm:$0xff]
    %v1208 = vadd.f32 %v1200, %v1204
    %v1209 = vadd.f32 %v1201, %v1205
    %v1210 = vadd.f32 %v1202, %v1206
    %v1211 = vadd.f32 %v1203, %v1207
    %v1212 = vmax.f32 %v1208, 0.0
    %v1213 = vmax.f32 %v1209, 0.0
    %v1214 = vmax.f32 %v1210, 0.0
    %v1215 = vmax.f32 %v1211, 0.0
    %1216 = vst.msk [vmem:[#allocation3] sm:$0xff] %vm413, %v1212
    %1217 = vst.msk [vmem:[#allocation3 + $0x8] sm:$0xff] %vm413, %v1213
    %1218 = vst.msk [vmem:[#allocation3 + $0x10] sm:$0xff] %vm413, %v1214
    %1219 = vst.msk [vmem:[#allocation3 + $0x18] sm:$0xff] %vm413, %v1215
    // Predicated region
    $region34: #{tpu_custom_call.1} parent=1 // pred_check
      _
    $region35: #{tpu_custom_call.1} parent=1 // pred_check_branch
      %1221 = sbr.rel (0) target = $region37
    $region36: #{tpu_custom_call.1} parent=1 // pred_region
      %s1223 = ssub.s32 512, 512
      %1224 = vsyncadd [#allocation4], %s1223
      %s1225 = sshll.u32 [#allocation3], 4
      %s1226 = int_to_ptr.vmem [resolvable:$true] %s1225
      %1231 = dma.vmem_to_hbm [thread:$0]  %s1226, 512, %s8, [#allocation4], 128, 128, 8
    $region37: #{tpu_custom_call.1} parent=1 // pred_fallthru
      _
    // Predicated region
    $region38: #{tpu_custom_call.1} parent=1 // pred_check
      _
    $region39: #{tpu_custom_call.1} parent=1 // pred_check_branch
      %1233 = sbr.rel (0) target = $region41
    $region40: #{tpu_custom_call.1} parent=1 // pred_region
      %1234 = dma.done [#allocation4], 512
    $region41: #{tpu_custom_call.1} parent=1 // pred_fallthru
      _
    %1235 = vsyncpa [#allocation4], 1

</llo_original>
